<compile_context>
chip_gen: v6e
topology: v6e:2x2x1
jax: 0.10.0
libtpu: 0.0.40
codegen_flags: <defaults>
</compile_context>

<pallas_src>
import functools

import jax
import jax.numpy as jnp
import numpy as np
from jax import lax
from jax.experimental import pallas as pl
from jax.experimental.pallas import tpu as pltpu


def gcn_kernel(a_ref, x_ref, w1_ref, b1_ref, w2_ref, b2_ref, w3_ref, b3_ref,
               wf_ref, bf_ref, o_ref, *, matmul_dtype):
    A = a_ref[...]                      # (Bblk, N, N)
    x = x_ref[...]                      # (Bblk, N, Fin)
    bblk, n, _ = A.shape

    # Normalization vector (identity folded in: colsum(A + I) == colsum(A) + 1).
    deg = jnp.sum(A, axis=1)                       # (Bblk, N)  == torch.sum(A_hat, 1) - 1
    s = lax.rsqrt(deg + (1.0 + 1e-5))              # (Bblk, N)
    s3 = s[:, :, None]                             # (Bblk, N, 1)
    s3_sq = s3 * s3

    a_mm = A.astype(matmul_dtype)

    def layer(h, w_ref, b_ref):
        # agg = L @ h  with  L = diag(s) A diag(s) + diag(s^2)   (L never materialized)
        sh = (s3 * h).astype(matmul_dtype)                               # (Bblk, N, Fin)
        agg = s3 * jnp.einsum("bij,bjf->bif", a_mm, sh,
                              preferred_element_type=jnp.float32) \
              + s3_sq * h                                                # (Bblk, N, Fin)
        # Shared-weight projection as one tall matmul: (Bblk*N, Fin) @ (Fin, Fout).
        fin = agg.shape[-1]
        w = w_ref[...]
        proj = jnp.dot(agg.reshape(bblk * n, fin).astype(matmul_dtype),
                       w.astype(matmul_dtype),
                       preferred_element_type=jnp.float32)
        proj = proj + b_ref[...]
        return jnp.maximum(proj, 0.0).reshape(bblk, n, w.shape[-1])

    h = layer(x.astype(jnp.float32), w1_ref, b1_ref)
    h = layer(h, w2_ref, b2_ref)
    h = layer(h, w3_ref, b3_ref)

    # Global max pool over nodes + fc head.
    # TODO(synk): nn.Dropout(p=0.2) in the fc head is treated as inference-mode identity.
    pooled = jnp.max(h, axis=1)                                          # (Bblk, F3)
    logits = jnp.dot(pooled.astype(matmul_dtype), wf_ref[...].astype(matmul_dtype),
                     preferred_element_type=jnp.float32) + bf_ref[...]   # (Bblk, OUT)
    o_ref[0] = logits.astype(o_ref.dtype)


def gcn_forward(x, A, gconv_params, fc_params, *, matmul_dtype=jnp.float32):
    """gconv_params = [(W1^T, b1), (W2^T, b2), (W3^T, b3)] with Wi^T: (Fin_i, Fout_i),
    bi: (1, Fout_i); fc_params = (Wfc^T, bfc) with Wfc^T: (F3, OUT), bfc: (1, OUT)."""
    B, N, Fin = x.shape
    (w1t, b1), (w2t, b2), (w3t, b3) = gconv_params
    wfct, bfc = fc_params
    out_f = wfct.shape[1]

    # 2 "parallel" grid steps when possible (v7x megacore); multiple graphs per step to
    # amortize fixed per-step overhead (v5e/v6e feedback).
    grid_g = 2 if (B >= 2 and B % 2 == 0) else 1
    bblk = B // grid_g

    def const_spec(shape):
        # Constant index map -> block stays resident in VMEM across grid steps.
        return pl.BlockSpec(shape, lambda g: (0,) * len(shape))

    kernel = functools.partial(gcn_kernel, matmul_dtype=matmul_dtype)

    out = pl.pallas_call(
        kernel,
        out_shape=jax.ShapeDtypeStruct((grid_g, bblk, out_f), x.dtype),
        grid_spec=pltpu.PrefetchScalarGridSpec(
            num_scalar_prefetch=0,
            grid=(grid_g,),
            in_specs=[
                pl.BlockSpec((bblk, N, N), lambda g: (g, 0, 0)),     # A  (per-step graph block)
                pl.BlockSpec((bblk, N, Fin), lambda g: (g, 0, 0)),   # x
                const_spec(w1t.shape), const_spec(b1.shape),
                const_spec(w2t.shape), const_spec(b2.shape),
                const_spec(w3t.shape), const_spec(b3.shape),
                const_spec(wfct.shape), const_spec(bfc.shape),
            ],
            out_specs=pl.BlockSpec((1, bblk, out_f), lambda g: (g, 0, 0)),
        ),
        compiler_params=pltpu.CompilerParams(dimension_semantics=("parallel",)),
    )(A, x, w1t, b1, w2t, b2, w3t, b3, wfct, bfc)

    out = out.reshape(B, out_f)
    if B == 1:                      # torch .squeeze() only matters when batch == 1
        out = out.reshape(out_f)
    return out


def init_linear(key, fan_in, fan_out):
    """Deterministic nn.Linear-style init: U(-1/sqrt(fan_in), 1/sqrt(fan_in))."""
    kw, kb = jax.random.split(key)
    bound = 1.0 / np.sqrt(fan_in)
    w = jax.random.uniform(kw, (fan_out, fan_in), jnp.float32, -bound, bound)
    b = jax.random.uniform(kb, (fan_out,), jnp.float32, -bound, bound)
    return w.T, b.reshape(1, fan_out)   # pass transposed weight + 2D bias to the kernel


def ref_forward(x, A, gconv_params, fc_params):
    """Pure-JAX reference mirroring the PyTorch GCN.forward (eval mode)."""
    B, N, _ = A.shape
    a_hat = A + jnp.eye(N, dtype=A.dtype)[None]
    d = (jnp.sum(a_hat, axis=1) + 1e-5) ** -0.5
    L = d[:, :, None] * a_hat * d[:, None, :]
    h = x
    for wt, b in gconv_params:
        h = jnp.maximum(jnp.einsum("bij,bjf->bif", L, h) @ wt + b, 0.0)
    pooled = jnp.max(h, axis=1)                 # torch.max(x, dim=1)[0]
    wfct, bfc = fc_params
    out = pooled @ wfct + bfc                   # Dropout == identity at inference
    return jnp.squeeze(out) if B == 1 else out


if __name__ == "__main__":
    # Small shapes consistent with the module: batch=4, nodes=16, in_features=8,
    # filters=[32, 32, 32], out_features=8.
    B, N, F_IN = 4, 16, 8
    FILTERS = [32, 32, 32]
    OUT_FEATURES = 8

    key = jax.random.PRNGKey(0)
    kx, ka, k1, k2, k3, kf = jax.random.split(key, 6)
    x = jax.random.normal(kx, (B, N, F_IN), jnp.float32)
    A = (jax.random.uniform(ka, (B, N, N), jnp.float32) > 0.5).astype(jnp.float32)

    gconv_params = []
    fan_in = F_IN
    for k, f in zip((k1, k2, k3), FILTERS):
        gconv_params.append(init_linear(k, fan_in, f))
        fan_in = f
    fc_params = init_linear(kf, FILTERS[-1], OUT_FEATURES)

    ref = ref_forward(x, A, gconv_params, fc_params)

    # f32 MXU path (strict check).
    out = jax.block_until_ready(gcn_forward(x, A, gconv_params, fc_params))
    assert out.shape == (B, OUT_FEATURES)
    np.testing.assert_allclose(np.asarray(out), np.asarray(ref), rtol=1e-4, atol=1e-4)

    # Optional bf16-input MXU path (v6e/v7x throughput recommendation); looser tolerance.
    out_bf16 = jax.block_until_ready(
        gcn_forward(x, A, gconv_params, fc_params, matmul_dtype=jnp.bfloat16))
    np.testing.assert_allclose(np.asarray(out_bf16), np.asarray(ref), rtol=5e-2, atol=5e-2)

    print("KERNEL_OK")
</pallas_src>

<mosaic_0001>
module attributes {stable_mosaic.version = 11 : i64} {
  func.func @gcn_kernel(%arg0: i32, %arg1: memref<2x16x16xf32, #tpu.memory_space<vmem>>, %arg2: memref<2x16x8xf32, #tpu.memory_space<vmem>>, %arg3: memref<8x32xf32, #tpu.memory_space<vmem>>, %arg4: memref<1x32xf32, #tpu.memory_space<vmem>>, %arg5: memref<32x32xf32, #tpu.memory_space<vmem>>, %arg6: memref<1x32xf32, #tpu.memory_space<vmem>>, %arg7: memref<32x32xf32, #tpu.memory_space<vmem>>, %arg8: memref<1x32xf32, #tpu.memory_space<vmem>>, %arg9: memref<32x8xf32, #tpu.memory_space<vmem>>, %arg10: memref<1x8xf32, #tpu.memory_space<vmem>>, %arg11: memref<1x2x8xf32, #tpu.memory_space<vmem>>) attributes {dimension_semantics = [#tpu.dimension_semantics<parallel>], iteration_bounds = array<i64: 2>, scalar_prefetch = 0 : i64, scratch_operands = 0 : i64, tpu.core_type = #tpu.core_type<tc>, window_params = [{transform_indices = @transform_0, window_bounds = array<i64: 2, 16, 16>}, {transform_indices = @transform_1, window_bounds = array<i64: 2, 16, 8>}, {pipeline_mode = #tpu.pipeline_mode<synchronous>, transform_indices = @transform_2, window_bounds = array<i64: 8, 32>}, {pipeline_mode = #tpu.pipeline_mode<synchronous>, transform_indices = @transform_3, window_bounds = array<i64: 1, 32>}, {pipeline_mode = #tpu.pipeline_mode<synchronous>, transform_indices = @transform_4, window_bounds = array<i64: 32, 32>}, {pipeline_mode = #tpu.pipeline_mode<synchronous>, transform_indices = @transform_5, window_bounds = array<i64: 1, 32>}, {pipeline_mode = #tpu.pipeline_mode<synchronous>, transform_indices = @transform_6, window_bounds = array<i64: 32, 32>}, {pipeline_mode = #tpu.pipeline_mode<synchronous>, transform_indices = @transform_7, window_bounds = array<i64: 1, 32>}, {pipeline_mode = #tpu.pipeline_mode<synchronous>, transform_indices = @transform_8, window_bounds = array<i64: 32, 8>}, {pipeline_mode = #tpu.pipeline_mode<synchronous>, transform_indices = @transform_9, window_bounds = array<i64: 1, 8>}, {transform_indices = @transform_10, window_bounds = array<i64: 1, 2, 8>}]} {
    %c0 = arith.constant 0 : index
    %c0_0 = arith.constant 0 : index
    %c0_1 = arith.constant 0 : index
    %0 = vector.load %arg1[%c0, %c0_0, %c0_1] : memref<2x16x16xf32, #tpu.memory_space<vmem>>, vector<2x16x16xf32>
    %c0_2 = arith.constant 0 : index
    %c0_3 = arith.constant 0 : index
    %c0_4 = arith.constant 0 : index
    %1 = vector.load %arg2[%c0_2, %c0_3, %c0_4] : memref<2x16x8xf32, #tpu.memory_space<vmem>>, vector<2x16x8xf32>
    %cst = arith.constant dense<0.000000e+00> : vector<2x16xf32>
    %2 = vector.multi_reduction <add>, %0, %cst [1] : vector<2x16x16xf32> to vector<2x16xf32>
    %cst_5 = arith.constant 1.000010e+00 : f32
    %3 = vector.broadcast %cst_5 : f32 to vector<2x16xf32>
    %4 = arith.addf %2, %3 : vector<2x16xf32>
    %5 = math.rsqrt %4 : vector<2x16xf32>
    %6 = vector.shape_cast %5 : vector<2x16xf32> to vector<2x16x1xf32>
    %7 = arith.mulf %6, %6 : vector<2x16x1xf32>
    %8 = vector.broadcast %6 : vector<2x16x1xf32> to vector<2x16x8xf32>
    %9 = arith.mulf %8, %1 : vector<2x16x8xf32>
    "tpu.trace_start"() <{level = 10 : i32, message = "bij,bjf->bif"}> : () -> ()
    %cst_6 = arith.constant dense<0.000000e+00> : vector<2x16x8xf32>
    %10 = tpu.matmul %0, %9, %cst_6 {dimension_numbers = #tpu.dot_dimension_numbers<[2], [1], [1], [2], [0, 0, 0, 1, 1, 2], [0], [0]>} : vector<2x16x16xf32>, vector<2x16x8xf32>, vector<2x16x8xf32> -> vector<2x16x8xf32>
    "tpu.trace_stop"() : () -> ()
    %11 = vector.broadcast %6 : vector<2x16x1xf32> to vector<2x16x8xf32>
    %12 = arith.mulf %11, %10 : vector<2x16x8xf32>
    %13 = vector.broadcast %7 : vector<2x16x1xf32> to vector<2x16x8xf32>
    %14 = arith.mulf %13, %1 : vector<2x16x8xf32>
    %15 = arith.addf %12, %14 : vector<2x16x8xf32>
    %c0_7 = arith.constant 0 : index
    %c0_8 = arith.constant 0 : index
    %16 = vector.load %arg3[%c0_7, %c0_8] : memref<8x32xf32, #tpu.memory_space<vmem>>, vector<8x32xf32>
    %17 = vector.shape_cast %15 : vector<2x16x8xf32> to vector<32x8xf32>
    %cst_9 = arith.constant dense<0.000000e+00> : vector<32x32xf32>
    %18 = tpu.matmul %17, %16, %cst_9 {dimension_numbers = #tpu.dot_dimension_numbers<[1], [0], [0], [1], [0, 0, 1, 1], [], []>} : vector<32x8xf32>, vector<8x32xf32>, vector<32x32xf32> -> vector<32x32xf32>
    %c0_10 = arith.constant 0 : index
    %c0_11 = arith.constant 0 : index
    %19 = vector.load %arg4[%c0_10, %c0_11] : memref<1x32xf32, #tpu.memory_space<vmem>>, vector<1x32xf32>
    %20 = vector.broadcast %19 : vector<1x32xf32> to vector<32x32xf32>
    %21 = arith.addf %18, %20 : vector<32x32xf32>
    %cst_12 = arith.constant 0.000000e+00 : f32
    %22 = vector.broadcast %cst_12 : f32 to vector<32x32xf32>
    %23 = arith.maximumf %21, %22 : vector<32x32xf32>
    %24 = vector.shape_cast %23 : vector<32x32xf32> to vector<2x16x32xf32>
    %25 = vector.broadcast %6 : vector<2x16x1xf32> to vector<2x16x32xf32>
    %26 = arith.mulf %25, %24 : vector<2x16x32xf32>
    "tpu.trace_start"() <{level = 10 : i32, message = "bij,bjf->bif"}> : () -> ()
    %cst_13 = arith.constant dense<0.000000e+00> : vector<2x16x32xf32>
    %27 = tpu.matmul %0, %26, %cst_13 {dimension_numbers = #tpu.dot_dimension_numbers<[2], [1], [1], [2], [0, 0, 0, 1, 1, 2], [0], [0]>} : vector<2x16x16xf32>, vector<2x16x32xf32>, vector<2x16x32xf32> -> vector<2x16x32xf32>
    "tpu.trace_stop"() : () -> ()
    %28 = vector.broadcast %6 : vector<2x16x1xf32> to vector<2x16x32xf32>
    %29 = arith.mulf %28, %27 : vector<2x16x32xf32>
    %30 = vector.broadcast %7 : vector<2x16x1xf32> to vector<2x16x32xf32>
    %31 = arith.mulf %30, %24 : vector<2x16x32xf32>
    %32 = arith.addf %29, %31 : vector<2x16x32xf32>
    %c0_14 = arith.constant 0 : index
    %c0_15 = arith.constant 0 : index
    %33 = vector.load %arg5[%c0_14, %c0_15] : memref<32x32xf32, #tpu.memory_space<vmem>>, vector<32x32xf32>
    %34 = vector.shape_cast %32 : vector<2x16x32xf32> to vector<32x32xf32>
    %cst_16 = arith.constant dense<0.000000e+00> : vector<32x32xf32>
    %35 = tpu.matmul %34, %33, %cst_16 {dimension_numbers = #tpu.dot_dimension_numbers<[1], [0], [0], [1], [0, 0, 1, 1], [], []>} : vector<32x32xf32>, vector<32x32xf32>, vector<32x32xf32> -> vector<32x32xf32>
    %c0_17 = arith.constant 0 : index
    %c0_18 = arith.constant 0 : index
    %36 = vector.load %arg6[%c0_17, %c0_18] : memref<1x32xf32, #tpu.memory_space<vmem>>, vector<1x32xf32>
    %37 = vector.broadcast %36 : vector<1x32xf32> to vector<32x32xf32>
    %38 = arith.addf %35, %37 : vector<32x32xf32>
    %cst_19 = arith.constant 0.000000e+00 : f32
    %39 = vector.broadcast %cst_19 : f32 to vector<32x32xf32>
    %40 = arith.maximumf %38, %39 : vector<32x32xf32>
    %41 = vector.shape_cast %40 : vector<32x32xf32> to vector<2x16x32xf32>
    %42 = vector.broadcast %6 : vector<2x16x1xf32> to vector<2x16x32xf32>
    %43 = arith.mulf %42, %41 : vector<2x16x32xf32>
    "tpu.trace_start"() <{level = 10 : i32, message = "bij,bjf->bif"}> : () -> ()
    %cst_20 = arith.constant dense<0.000000e+00> : vector<2x16x32xf32>
    %44 = tpu.matmul %0, %43, %cst_20 {dimension_numbers = #tpu.dot_dimension_numbers<[2], [1], [1], [2], [0, 0, 0, 1, 1, 2], [0], [0]>} : vector<2x16x16xf32>, vector<2x16x32xf32>, vector<2x16x32xf32> -> vector<2x16x32xf32>
    "tpu.trace_stop"() : () -> ()
    %45 = vector.broadcast %6 : vector<2x16x1xf32> to vector<2x16x32xf32>
    %46 = arith.mulf %45, %44 : vector<2x16x32xf32>
    %47 = vector.broadcast %7 : vector<2x16x1xf32> to vector<2x16x32xf32>
    %48 = arith.mulf %47, %41 : vector<2x16x32xf32>
    %49 = arith.addf %46, %48 : vector<2x16x32xf32>
    %c0_21 = arith.constant 0 : index
    %c0_22 = arith.constant 0 : index
    %50 = vector.load %arg7[%c0_21, %c0_22] : memref<32x32xf32, #tpu.memory_space<vmem>>, vector<32x32xf32>
    %51 = vector.shape_cast %49 : vector<2x16x32xf32> to vector<32x32xf32>
    %cst_23 = arith.constant dense<0.000000e+00> : vector<32x32xf32>
    %52 = tpu.matmul %51, %50, %cst_23 {dimension_numbers = #tpu.dot_dimension_numbers<[1], [0], [0], [1], [0, 0, 1, 1], [], []>} : vector<32x32xf32>, vector<32x32xf32>, vector<32x32xf32> -> vector<32x32xf32>
    %c0_24 = arith.constant 0 : index
    %c0_25 = arith.constant 0 : index
    %53 = vector.load %arg8[%c0_24, %c0_25] : memref<1x32xf32, #tpu.memory_space<vmem>>, vector<1x32xf32>
    %54 = vector.broadcast %53 : vector<1x32xf32> to vector<32x32xf32>
    %55 = arith.addf %52, %54 : vector<32x32xf32>
    %cst_26 = arith.constant 0.000000e+00 : f32
    %56 = vector.broadcast %cst_26 : f32 to vector<32x32xf32>
    %57 = arith.maximumf %55, %56 : vector<32x32xf32>
    %58 = vector.shape_cast %57 : vector<32x32xf32> to vector<2x16x32xf32>
    %cst_27 = arith.constant dense<0xFF800000> : vector<2x32xf32>
    %59 = vector.multi_reduction <maximumf>, %58, %cst_27 [1] : vector<2x16x32xf32> to vector<2x32xf32>
    %c0_28 = arith.constant 0 : index
    %c0_29 = arith.constant 0 : index
    %60 = vector.load %arg9[%c0_28, %c0_29] : memref<32x8xf32, #tpu.memory_space<vmem>>, vector<32x8xf32>
    %cst_30 = arith.constant dense<0.000000e+00> : vector<2x8xf32>
    %61 = tpu.matmul %59, %60, %cst_30 {dimension_numbers = #tpu.dot_dimension_numbers<[1], [0], [0], [1], [0, 0, 1, 1], [], []>} : vector<2x32xf32>, vector<32x8xf32>, vector<2x8xf32> -> vector<2x8xf32>
    %c0_31 = arith.constant 0 : index
    %c0_32 = arith.constant 0 : index
    %62 = vector.load %arg10[%c0_31, %c0_32] : memref<1x8xf32, #tpu.memory_space<vmem>>, vector<1x8xf32>
    %63 = vector.broadcast %62 : vector<1x8xf32> to vector<2x8xf32>
    %64 = arith.addf %61, %63 : vector<2x8xf32>
    %c0_33 = arith.constant 0 : index
    %c0_34 = arith.constant 0 : index
    %c0_35 = arith.constant 0 : index
    %65 = vector.load %arg11[%c0_33, %c0_34, %c0_35] : memref<1x2x8xf32, #tpu.memory_space<vmem>>, vector<1x2x8xf32>
    %66 = vector.shape_cast %65 : vector<1x2x8xf32> to vector<2x8xf32>
    %67 = vector.shape_cast %64 : vector<2x8xf32> to vector<1x2x8xf32>
    tpu.vector_store %arg11[%c0_33, %c0_34, %c0_35], %67 {strides = array<i32>} : memref<1x2x8xf32, #tpu.memory_space<vmem>>, vector<1x2x8xf32>,
    return
  }
  func.func @transform_0(%arg0: i32) -> (i32, i32, i32) {
    %c0_i32 = arith.constant 0 : i32
    %c0_i32_0 = arith.constant 0 : i32
    %c0_i32_1 = arith.constant 0 : i32
    return %arg0, %c0_i32, %c0_i32_0 : i32, i32, i32
  }
  func.func @transform_1(%arg0: i32) -> (i32, i32, i32) {
    %c0_i32 = arith.constant 0 : i32
    %c0_i32_0 = arith.constant 0 : i32
    %c0_i32_1 = arith.constant 0 : i32
    return %arg0, %c0_i32, %c0_i32_0 : i32, i32, i32
  }
  func.func @transform_2(%arg0: i32) -> (i32, i32) {
    %c0_i32 = arith.constant 0 : i32
    %c0_i32_0 = arith.constant 0 : i32
    %c0_i32_1 = arith.constant 0 : i32
    return %c0_i32, %c0_i32_0 : i32, i32
  }
  func.func @transform_3(%arg0: i32) -> (i32, i32) {
    %c0_i32 = arith.constant 0 : i32
    %c0_i32_0 = arith.constant 0 : i32
    %c0_i32_1 = arith.constant 0 : i32
    return %c0_i32, %c0_i32_0 : i32, i32
  }
  func.func @transform_4(%arg0: i32) -> (i32, i32) {
    %c0_i32 = arith.constant 0 : i32
    %c0_i32_0 = arith.constant 0 : i32
    %c0_i32_1 = arith.constant 0 : i32
    return %c0_i32, %c0_i32_0 : i32, i32
  }
  func.func @transform_5(%arg0: i32) -> (i32, i32) {
    %c0_i32 = arith.constant 0 : i32
    %c0_i32_0 = arith.constant 0 : i32
    %c0_i32_1 = arith.constant 0 : i32
    return %c0_i32, %c0_i32_0 : i32, i32
  }
  func.func @transform_6(%arg0: i32) -> (i32, i32) {
    %c0_i32 = arith.constant 0 : i32
    %c0_i32_0 = arith.constant 0 : i32
    %c0_i32_1 = arith.constant 0 : i32
    return %c0_i32, %c0_i32_0 : i32, i32
  }
  func.func @transform_7(%arg0: i32) -> (i32, i32) {
    %c0_i32 = arith.constant 0 : i32
    %c0_i32_0 = arith.constant 0 : i32
    %c0_i32_1 = arith.constant 0 : i32
    return %c0_i32, %c0_i32_0 : i32, i32
  }
  func.func @transform_8(%arg0: i32) -> (i32, i32) {
    %c0_i32 = arith.constant 0 : i32
    %c0_i32_0 = arith.constant 0 : i32
    %c0_i32_1 = arith.constant 0 : i32
    return %c0_i32, %c0_i32_0 : i32, i32
  }
  func.func @transform_9(%arg0: i32) -> (i32, i32) {
    %c0_i32 = arith.constant 0 : i32
    %c0_i32_0 = arith.constant 0 : i32
    %c0_i32_1 = arith.constant 0 : i32
    return %c0_i32, %c0_i32_0 : i32, i32
  }
  func.func @transform_10(%arg0: i32) -> (i32, i32, i32) {
    %c0_i32 = arith.constant 0 : i32
    %c0_i32_0 = arith.constant 0 : i32
    %c0_i32_1 = arith.constant 0 : i32
    return %arg0, %c0_i32, %c0_i32_0 : i32, i32, i32
  }
}

</mosaic_0001>

<llo_original>
// kernel: tpu_custom_call.1
$region0: #{tpu_custom_call.1}
  #allocation0 [shape = 'u32[]', space=smem, size = 0x4, offset = 0x4, fixed_abs, tag = 'smem constant byte address 0x4 - core index']
  #allocation1 [shape = 'u32[144,128]{1,0:T(1,128)}', space=vmem, size = 0x12000, scoped, tag = 'internal scratch']
  %s0 = inlined_call_operand.vmem [shape: f32[4,16,16], index: 0, kind: input, shape index: {}]
  %s1 = inlined_call_operand.vmem [shape: f32[4,16,8], index: 1, kind: input, shape index: {}]
  %s2 = inlined_call_operand.vmem [shape: f32[8,32], index: 2, kind: input, shape index: {}]
  %s3 = inlined_call_operand.vmem [shape: f32[1,32], index: 3, kind: input, shape index: {}]
  %s4 = inlined_call_operand.vmem [shape: f32[32,32], index: 4, kind: input, shape index: {}]
  %s5 = inlined_call_operand.vmem [shape: f32[1,32], index: 5, kind: input, shape index: {}]
  %s6 = inlined_call_operand.hbm [shape: f32[32,32], index: 6, kind: input, shape index: {}]
  %s7 = inlined_call_operand.vmem [shape: f32[1,32], index: 7, kind: input, shape index: {}]
  %s8 = inlined_call_operand.vmem [shape: f32[32,8], index: 8, kind: input, shape index: {}]
  %s9 = inlined_call_operand.vmem [shape: f32[1,8], index: 9, kind: input, shape index: {}]
  %s10 = inlined_call_operand.hbm [shape: f32[2,2,8], index: 10, kind: output, shape index: {}]
  %s11 = sld [smem:[#allocation0]]
  $region77: #{tpu_custom_call.1} parent=0
    _
  %s13 = ssub.s32 1, %s11
  %s14 = scalar_select 0, %s13, %s11
  $region1: #{tpu_custom_call.1} parent=0
    #allocation2 [shape = 'u8[16384]{0}', space=vmem, size = 0x4000, scoped, tag = 'input window, operand 6, single buffered']
    #allocation3 [shape = 's32[2]{0}', space=sflag, size = 0x8, scoped, tag = 'scoped memory for tpu_custom_call.1']
    #allocation4 [shape = 's32[2]{0}', space=sflag, size = 0x8, scoped, tag = 'scoped memory for tpu_custom_call.1']
    #allocation5 [shape = 'u8[2048]{0}', space=vmem, size = 0x800, scoped, tag = 'output window, operand 0']
    %15 = vsyncpa [#allocation3], 0
    %16 = vsyncpa [#allocation4], 0
    %s17 = scalar_lea.sflag [#allocation4], 1
    %18 = vsyncpa %s17, 0
    loop: start=0, step=1, limit=4
    $region2: #{tpu_custom_call.1} parent=1 // loop_pre_header
      _
    $region3: #{tpu_custom_call.1} parent=1 // loop_header
      %s20 = sphi 0, %s24
      %p21 = scmp.ge.s32.totalorder %s20, 4
      %s30 = sphi 0, %s32
      %s33 = sphi 0, %s30
      %s34 = sphi 0, %s33
      %s50 = sphi 0, %s34
      %s56 = sphi 0, %s58
      %s59 = sphi 0, %s56
      %s60 = sphi 0, %s59
      %s76 = sphi 0, %s60
      %s80 = sphi 0, %s80
      %s82 = sphi 0, %s80
      %s83 = sphi 0, %s82
      %s97 = sphi 0, %s83
      %s101 = sphi 0, %s101
      %s103 = sphi 0, %s101
      %s104 = sphi 0, %s103
      %s118 = sphi 0, %s104
      %s122 = sphi 0, %s122
      %s124 = sphi 0, %s122
      %s125 = sphi 0, %s124
      %s139 = sphi 0, %s125
      %s143 = sphi 0, %s143
      %s145 = sphi 0, %s143
      %s146 = sphi 0, %s145
      %s160 = sphi 0, %s146
      %s164 = sphi 0, %s164
      %s166 = sphi 0, %s164
      %s167 = sphi 0, %s166
      %s181 = sphi 0, %s167
      %s185 = sphi 0, %s185
      %s187 = sphi 0, %s185
      %s188 = sphi 0, %s187
      %s202 = sphi 0, %s188
      %s206 = sphi 0, %s206
      %s208 = sphi 0, %s206
      %s209 = sphi 0, %s208
      %s223 = sphi 0, %s209
      %s227 = sphi 0, %s227
      %s229 = sphi 0, %s227
      %s230 = sphi 0, %s229
      %s244 = sphi 0, %s230
      %s250 = sphi 0, %s252
      %s253 = sphi 0, %s250
      %s254 = sphi 0, %s253
      %s270 = sphi 0, %s254
    $region4: #{tpu_custom_call.1} parent=1 // loop_header_branch
      %23 = sbr.rel (%p21) target = $region8
    $region5: #{tpu_custom_call.1} parent=1 // loop_body
      %s25 = ssub.s32 %s20, 1
      %s26 = ssub.s32 %s20, 2
      %s27 = sadd.s32 %s20, 1
      %s28 = ssub.s32 %s20, %s27
      %p29 = scmp.eq.s32.totalorder %s28, 0
      %s31 = sadd.s32 %s30, 1
      %s32 = scalar_select %p29, %s30, %s31
      %p35 = pneg %p29
      %p36 = scmp.eq.s32.totalorder %s20, 1
      %p37 = por %p35, %p36
      %p38 = scmp.ne.s32.totalorder %s30, %s33
      %p39 = scmp.eq.s32.totalorder %s20, 0
      %p40 = por %p38, %p39
      %p41 = scmp.ne.s32.totalorder %s30, %s33
      %p42 = scmp.eq.s32.totalorder %s25, 1
      %p43 = por %p41, %p42
      %p44 = scmp.ne.s32.totalorder %s33, %s34
      %p45 = scmp.eq.s32.totalorder %s25, 0
      %p46 = por %p44, %p45
      %p47 = scmp.ne.s32.totalorder %s33, %s34
      %p48 = scmp.eq.s32.totalorder %s26, 1
      %p49 = por %p47, %p48
      %p51 = scmp.ne.s32.totalorder %s34, %s50
      %p52 = scmp.eq.s32.totalorder %s26, 0
      %p53 = por %p51, %p52
      %s54 = ssub.s32 %s20, %s27
      %p55 = scmp.eq.s32.totalorder %s54, 0
      %s57 = sadd.s32 %s56, 1
      %s58 = scalar_select %p55, %s56, %s57
      %p61 = pneg %p55
      %p62 = scmp.eq.s32.totalorder %s20, 1
      %p63 = por %p61, %p62
      %p64 = scmp.ne.s32.totalorder %s56, %s59
      %p65 = scmp.eq.s32.totalorder %s20, 0
      %p66 = por %p64, %p65
      %p67 = scmp.ne.s32.totalorder %s56, %s59
      %p68 = scmp.eq.s32.totalorder %s25, 1
      %p69 = por %p67, %p68
      %p70 = scmp.ne.s32.totalorder %s59, %s60
      %p71 = scmp.eq.s32.totalorder %s25, 0
      %p72 = por %p70, %p71
      %p73 = scmp.ne.s32.totalorder %s59, %s60
      %p74 = scmp.eq.s32.totalorder %s26, 1
      %p75 = por %p73, %p74
      %p77 = scmp.ne.s32.totalorder %s60, %s76
      %p78 = scmp.eq.s32.totalorder %s26, 0
      %p79 = por %p77, %p78
      %s81 = sadd.s32 %s80, 1
      %p84 = scmp.eq.s32.totalorder %s20, 1
      %p85 = scmp.ne.s32.totalorder %s80, %s82
      %p86 = scmp.eq.s32.totalorder %s20, 0
      %p87 = por %p85, %p86
      %p88 = scmp.ne.s32.totalorder %s80, %s82
      %p89 = scmp.eq.s32.totalorder %s25, 1
      %p90 = por %p88, %p89
      %p91 = scmp.ne.s32.totalorder %s82, %s83
      %p92 = scmp.eq.s32.totalorder %s25, 0
      %p93 = por %p91, %p92
      %p94 = scmp.ne.s32.totalorder %s82, %s83
      %p95 = scmp.eq.s32.totalorder %s26, 1
      %p96 = por %p94, %p95
      %p98 = scmp.ne.s32.totalorder %s83, %s97
      %p99 = scmp.eq.s32.totalorder %s26, 0
      %p100 = por %p98, %p99
      %s102 = sadd.s32 %s101, 1
      %p105 = scmp.eq.s32.totalorder %s20, 1
      %p106 = scmp.ne.s32.totalorder %s101, %s103
      %p107 = scmp.eq.s32.totalorder %s20, 0
      %p108 = por %p106, %p107
      %p109 = scmp.ne.s32.totalorder %s101, %s103
      %p110 = scmp.eq.s32.totalorder %s25, 1
      %p111 = por %p109, %p110
      %p112 = scmp.ne.s32.totalorder %s103, %s104
      %p113 = scmp.eq.s32.totalorder %s25, 0
      %p114 = por %p112, %p113
      %p115 = scmp.ne.s32.totalorder %s103, %s104
      %p116 = scmp.eq.s32.totalorder %s26, 1
      %p117 = por %p115, %p116
      %p119 = scmp.ne.s32.totalorder %s104, %s118
      %p120 = scmp.eq.s32.totalorder %s26, 0
      %p121 = por %p119, %p120
      %s123 = sadd.s32 %s122, 1
      %p126 = scmp.eq.s32.totalorder %s20, 1
      %p127 = scmp.ne.s32.totalorder %s122, %s124
      %p128 = scmp.eq.s32.totalorder %s20, 0
      %p129 = por %p127, %p128
      %p130 = scmp.ne.s32.totalorder %s122, %s124
      %p131 = scmp.eq.s32.totalorder %s25, 1
      %p132 = por %p130, %p131
      %p133 = scmp.ne.s32.totalorder %s124, %s125
      %p134 = scmp.eq.s32.totalorder %s25, 0
      %p135 = por %p133, %p134
      %p136 = scmp.ne.s32.totalorder %s124, %s125
      %p137 = scmp.eq.s32.totalorder %s26, 1
      %p138 = por %p136, %p137
      %p140 = scmp.ne.s32.totalorder %s125, %s139
      %p141 = scmp.eq.s32.totalorder %s26, 0
      %p142 = por %p140, %p141
      %s144 = sadd.s32 %s143, 1
      %p147 = scmp.eq.s32.totalorder %s20, 1
      %p148 = scmp.ne.s32.totalorder %s143, %s145
      %p149 = scmp.eq.s32.totalorder %s20, 0
      %p150 = por %p148, %p149
      %p151 = scmp.ne.s32.totalorder %s143, %s145
      %p152 = scmp.eq.s32.totalorder %s25, 1
      %p153 = por %p151, %p152
      %p154 = scmp.ne.s32.totalorder %s145, %s146
      %p155 = scmp.eq.s32.totalorder %s25, 0
      %p156 = por %p154, %p155
      %p157 = scmp.ne.s32.totalorder %s145, %s146
      %p158 = scmp.eq.s32.totalorder %s26, 1
      %p159 = por %p157, %p158
      %p161 = scmp.ne.s32.totalorder %s146, %s160
      %p162 = scmp.eq.s32.totalorder %s26, 0
      %p163 = por %p161, %p162
      %s165 = sadd.s32 %s164, 1
      %p168 = scmp.eq.s32.totalorder %s20, 1
      %p169 = scmp.ne.s32.totalorder %s164, %s166
      %p170 = scmp.eq.s32.totalorder %s20, 0
      %p171 = por %p169, %p170
      %p172 = scmp.ne.s32.totalorder %s164, %s166
      %p173 = scmp.eq.s32.totalorder %s25, 1
      %p174 = por %p172, %p173
      %p175 = scmp.ne.s32.totalorder %s166, %s167
      %p176 = scmp.eq.s32.totalorder %s25, 0
      %p177 = por %p175, %p176
      %p178 = scmp.ne.s32.totalorder %s166, %s167
      %p179 = scmp.eq.s32.totalorder %s26, 1
      %p180 = por %p178, %p179
      %p182 = scmp.ne.s32.totalorder %s167, %s181
      %p183 = scmp.eq.s32.totalorder %s26, 0
      %p184 = por %p182, %p183
      %s186 = sadd.s32 %s185, 1
      %p189 = scmp.eq.s32.totalorder %s20, 1
      %p190 = scmp.ne.s32.totalorder %s185, %s187
      %p191 = scmp.eq.s32.totalorder %s20, 0
      %p192 = por %p190, %p191
      %p193 = scmp.ne.s32.totalorder %s185, %s187
      %p194 = scmp.eq.s32.totalorder %s25, 1
      %p195 = por %p193, %p194
      %p196 = scmp.ne.s32.totalorder %s187, %s188
      %p197 = scmp.eq.s32.totalorder %s25, 0
      %p198 = por %p196, %p197
      %p199 = scmp.ne.s32.totalorder %s187, %s188
      %p200 = scmp.eq.s32.totalorder %s26, 1
      %p201 = por %p199, %p200
      %p203 = scmp.ne.s32.totalorder %s188, %s202
      %p204 = scmp.eq.s32.totalorder %s26, 0
      %p205 = por %p203, %p204
      %s207 = sadd.s32 %s206, 1
      %p210 = scmp.eq.s32.totalorder %s20, 1
      %p211 = scmp.ne.s32.totalorder %s206, %s208
      %p212 = scmp.eq.s32.totalorder %s20, 0
      %p213 = por %p211, %p212
      %p214 = scmp.ne.s32.totalorder %s206, %s208
      %p215 = scmp.eq.s32.totalorder %s25, 1
      %p216 = por %p214, %p215
      %p217 = scmp.ne.s32.totalorder %s208, %s209
      %p218 = scmp.eq.s32.totalorder %s25, 0
      %p219 = por %p217, %p218
      %p220 = scmp.ne.s32.totalorder %s208, %s209
      %p221 = scmp.eq.s32.totalorder %s26, 1
      %p222 = por %p220, %p221
      %p224 = scmp.ne.s32.totalorder %s209, %s223
      %p225 = scmp.eq.s32.totalorder %s26, 0
      %p226 = por %p224, %p225
      %s228 = sadd.s32 %s227, 1
      %p231 = scmp.eq.s32.totalorder %s20, 1
      %p232 = scmp.ne.s32.totalorder %s227, %s229
      %p233 = scmp.eq.s32.totalorder %s20, 0
      %p234 = por %p232, %p233
      %p235 = scmp.ne.s32.totalorder %s227, %s229
      %p236 = scmp.eq.s32.totalorder %s25, 1
      %p237 = por %p235, %p236
      %p238 = scmp.ne.s32.totalorder %s229, %s230
      %p239 = scmp.eq.s32.totalorder %s25, 0
      %p240 = por %p238, %p239
      %p241 = scmp.ne.s32.totalorder %s229, %s230
      %p242 = scmp.eq.s32.totalorder %s26, 1
      %p243 = por %p241, %p242
      %p245 = scmp.ne.s32.totalorder %s230, %s244
      %p246 = scmp.eq.s32.totalorder %s26, 0
      %p247 = por %p245, %p246
      %s248 = ssub.s32 %s20, %s27
      %p249 = scmp.eq.s32.totalorder %s248, 0
      %s251 = sadd.s32 %s250, 1
      %s252 = scalar_select %p249, %s250, %s251
      %p255 = pneg %p249
      %p256 = scmp.eq.s32.totalorder %s20, 1
      %p257 = por %p255, %p256
      %p258 = scmp.ne.s32.totalorder %s250, %s253
      %p259 = scmp.eq.s32.totalorder %s20, 0
      %p260 = por %p258, %p259
      %p261 = scmp.ne.s32.totalorder %s250, %s253
      %p262 = scmp.eq.s32.totalorder %s25, 1
      %p263 = por %p261, %p262
      %p264 = scmp.ne.s32.totalorder %s253, %s254
      %p265 = scmp.eq.s32.totalorder %s25, 0
      %p266 = por %p264, %p265
      %p267 = scmp.ne.s32.totalorder %s253, %s254
      %p268 = scmp.eq.s32.totalorder %s26, 1
      %p269 = por %p267, %p268
      %p271 = scmp.ne.s32.totalorder %s254, %s270
      %p272 = scmp.eq.s32.totalorder %s26, 0
      %p273 = por %p271, %p272
      %p274 = scmp.le.s32.totalorder 1, %s20
      %p275 = scmp.lt.s32.totalorder %s20, 3
      %p276 = pnand %p274, %p275
      %p277 = pneg %p276
      // Predicated region
      $region9: #{tpu_custom_call.1} parent=5 // pred_check
        _
      $region10: #{tpu_custom_call.1} parent=5 // pred_check_branch
        %279 = sbr.rel (%p276) target = $region12
      $region11: #{tpu_custom_call.1} parent=5 // pred_region
        %s280 = ssub.s32 %s20, 1
        // Predicated region
        $region13: #{tpu_custom_call.1} parent=11 // pred_check
          %p281 = pneg %p93
        $region14: #{tpu_custom_call.1} parent=11 // pred_check_branch
          %283 = sbr.rel (%p281) target = $region16
        $region15: #{tpu_custom_call.1} parent=11 // pred_region
          _
        $region16: #{tpu_custom_call.1} parent=11 // pred_fallthru
          _
        // Predicated region
        $region17: #{tpu_custom_call.1} parent=11 // pred_check
          %p284 = pneg %p114
        $region18: #{tpu_custom_call.1} parent=11 // pred_check_branch
          %286 = sbr.rel (%p284) target = $region20
        $region19: #{tpu_custom_call.1} parent=11 // pred_region
          _
        $region20: #{tpu_custom_call.1} parent=11 // pred_fallthru
          _
        // Predicated region
        $region21: #{tpu_custom_call.1} parent=11 // pred_check
          %p287 = pneg %p135
        $region22: #{tpu_custom_call.1} parent=11 // pred_check_branch
          %289 = sbr.rel (%p287) target = $region24
        $region23: #{tpu_custom_call.1} parent=11 // pred_region
          _
        $region24: #{tpu_custom_call.1} parent=11 // pred_fallthru
          _
        // Predicated region
        $region25: #{tpu_custom_call.1} parent=11 // pred_check
          %p290 = pneg %p156
        $region26: #{tpu_custom_call.1} parent=11 // pred_check_branch
          %292 = sbr.rel (%p290) target = $region28
        $region27: #{tpu_custom_call.1} parent=11 // pred_region
          _
        $region28: #{tpu_custom_call.1} parent=11 // pred_fallthru
          _
        // Predicated region
        $region29: #{tpu_custom_call.1} parent=11 // pred_check
          %p293 = pneg %p177
        $region30: #{tpu_custom_call.1} parent=11 // pred_check_branch
          %295 = sbr.rel (%p293) target = $region32
        $region31: #{tpu_custom_call.1} parent=11 // pred_region
          %s297 = ssub.s32 512, 512
          %298 = vsyncadd [#allocation3], %s297
          %s299 = sshll.u32 [#allocation2], 4
          %s300 = int_to_ptr.vmem [resolvable:$true] %s299
          %305 = dma.hbm_to_vmem [thread:$0]  %s6, 512, %s300, [#allocation3], 128, 128, 8
        $region32: #{tpu_custom_call.1} parent=11 // pred_fallthru
          _
        // Predicated region
        $region33: #{tpu_custom_call.1} parent=11 // pred_check
          %p306 = pneg %p198
        $region34: #{tpu_custom_call.1} parent=11 // pred_check_branch
          %308 = sbr.rel (%p306) target = $region36
        $region35: #{tpu_custom_call.1} parent=11 // pred_region
          _
        $region36: #{tpu_custom_call.1} parent=11 // pred_fallthru
          _
        // Predicated region
        $region37: #{tpu_custom_call.1} parent=11 // pred_check
          %p309 = pneg %p219
        $region38: #{tpu_custom_call.1} parent=11 // pred_check_branch
          %311 = sbr.rel (%p309) target = $region40
        $region39: #{tpu_custom_call.1} parent=11 // pred_region
          _
        $region40: #{tpu_custom_call.1} parent=11 // pred_fallthru
          _
        // Predicated region
        $region41: #{tpu_custom_call.1} parent=11 // pred_check
          %p312 = pneg %p240
        $region42: #{tpu_custom_call.1} parent=11 // pred_check_branch
          %314 = sbr.rel (%p312) target = $region44
        $region43: #{tpu_custom_call.1} parent=11 // pred_region
          _
        $region44: #{tpu_custom_call.1} parent=11 // pred_fallthru
          _
      $region12: #{tpu_custom_call.1} parent=5 // pred_fallthru
        _
      %p315 = scmp.lt.s32.totalorder %s20, 2
      // Predicated region
      $region45: #{tpu_custom_call.1} parent=5 // pred_check
        %p316 = pneg %p315
      $region46: #{tpu_custom_call.1} parent=5 // pred_check_branch
        %318 = sbr.rel (%p316) target = $region48
      $region47: #{tpu_custom_call.1} parent=5 // pred_region
        // Predicated region
        $region49: #{tpu_custom_call.1} parent=47 // pred_check
          %p319 = pneg %p40
        $region50: #{tpu_custom_call.1} parent=47 // pred_check_branch
          %321 = sbr.rel (%p319) target = $region52
        $region51: #{tpu_custom_call.1} parent=47 // pred_region
          %s322 = smul.u32 2, %s20
          %p323 = scmp.lt.s32.totalorder %s322, 3
          %s324 = scalar_select %p323, %s322, 3
          %s325 = smul.addr %s324, 2
          %s326 = smul.addr %s325, 8
          %s327 = scalar_lea.vmem %s0, %s326
          %s328 = smul.u32 2, %s20
        $region52: #{tpu_custom_call.1} parent=47 // pred_fallthru
          _
        // Predicated region
        $region53: #{tpu_custom_call.1} parent=47 // pred_check
          %p329 = pneg %p66
        $region54: #{tpu_custom_call.1} parent=47 // pred_check_branch
          %331 = sbr.rel (%p329) target = $region56
        $region55: #{tpu_custom_call.1} parent=47 // pred_region
          %s332 = smul.u32 2, %s20
          %p333 = scmp.lt.s32.totalorder %s332, 3
          %s334 = scalar_select %p333, %s332, 3
          %s335 = smul.addr %s334, 2
          %s336 = smul.addr %s335, 8
          %s337 = scalar_lea.vmem %s1, %s336
          %s338 = smul.u32 2, %s20
        $region56: #{tpu_custom_call.1} parent=47 // pred_fallthru
          _
      $region48: #{tpu_custom_call.1} parent=5 // pred_fallthru
        _
      %p339 = scmp.le.s32.totalorder 1, %s20
      %p340 = scmp.lt.s32.totalorder %s20, 3
      %p341 = pnand %p339, %p340
      %p342 = pneg %p341
      // Predicated region
      $region57: #{tpu_custom_call.1} parent=5 // pred_check
        _
      $region58: #{tpu_custom_call.1} parent=5 // pred_check_branch
        %344 = sbr.rel (%p341) target = $region60
      $region59: #{tpu_custom_call.1} parent=5 // pred_region
        %s345 = ssub.s32 %s20, 1
        // Predicated region
        $region61: #{tpu_custom_call.1} parent=59 // pred_check
          %p346 = pneg %p177
        $region62: #{tpu_custom_call.1} parent=59 // pred_check_branch
          %348 = sbr.rel (%p346) target = $region64
        $region63: #{tpu_custom_call.1} parent=59 // pred_region
          %349 = dma.done [#allocation3], 512
        $region64: #{tpu_custom_call.1} parent=59 // pred_fallthru
          _
        %s350 = smul.u32 2, %s25
        %p351 = scmp.lt.s32.totalorder %s350, 3
        %s352 = scalar_select %p351, %s350, 3
        %s353 = smul.addr %s352, 2
        %s354 = smul.addr %s353, 8
        %s355 = scalar_lea.vmem %s0, %s354
        %p356 = pneg %p46
        %p357 = pneg %p43
        %s358 = smul.u32 2, %s25
        %p359 = scmp.lt.s32.totalorder %s358, 3
        %s360 = scalar_select %p359, %s358, 3
        %s361 = smul.addr %s360, 2
        %s362 = smul.addr %s361, 8
        %s363 = scalar_lea.vmem %s1, %s362
        %p364 = pneg %p72
        %p365 = pneg %p69
        %p366 = pneg %p93
        %p367 = pneg %p90
        %p368 = pneg %p114
        %p369 = pneg %p111
        %p370 = pneg %p135
        %p371 = pneg %p132
        %p372 = pneg %p156
        %p373 = pneg %p153
        %p374 = pneg %p177
        %p375 = pneg %p174
        %p376 = pneg %p198
        %p377 = pneg %p195
        %p378 = pneg %p219
        %p379 = pneg %p216
        %p380 = pneg %p240
        %p381 = pneg %p237
        %p382 = pneg %p266
        %p383 = pneg %p263
        %s384 = sand.u32 %s253, 1
        %s385 = scalar_lea.sflag [#allocation4], %s384
        %s386 = sand.u32 %s253, 1
        %s387 = smul.addr %s386, 2
        %s388 = scalar_lea.vmem [#allocation5], %s387
        %s389 = smul.u32 2, %s25
        %p390 = scmp.lt.s32.totalorder %s389, 3
        %s391 = scalar_select %p390, %s389, 3
        %s392 = smul.addr %s391, 2
        %s393 = smul.addr %s392, 8
        %s394 = scalar_lea.vmem %s0, %s393
        %s395 = smul.u32 2, %s25
        %s396 = smul.u32 2, %s25
        %p397 = scmp.lt.s32.totalorder %s396, 3
        %s398 = scalar_select %p397, %s396, 3
        %s399 = smul.addr %s398, 2
        %s400 = smul.addr %s399, 8
        %s401 = scalar_lea.vmem %s1, %s400
        %s402 = smul.u32 2, %s25
        %v403 = vld [vmem:[%s394] sm:$0xff]
        %v404 = vld [vmem:[%s394 + $0x8] sm:$0xff]
        %v405 = vld [vmem:[%s394 + $0x10] sm:$0xff]
        %v406 = vld [vmem:[%s394 + $0x18] sm:$0xff]
        %v407 = vld [vmem:[%s401] sm:$0xff]
        %v408 = vld [vmem:[%s401 + $0x8] sm:$0xff]
        %v409 = vld [vmem:[%s401 + $0x10] sm:$0xff]
        %v410 = vld [vmem:[%s401 + $0x18] sm:$0xff]
        %vm411 = vcmask 130048
        %v412 = vsel %vm411, %v403, 0.0
        %v413 = vsel %vm411, %v404, 0.0
        %v414 = vadd.f32 %v412, %v413
        %v415 = vrot.slane %v414, 4
        %v416 = vadd.f32 %v414, %v415
        %v417 = vrot.slane %v416, 2
        %v418 = vadd.f32 %v416, %v417
        %v419 = vrot.slane %v418, 1
        %v420 = vadd.f32 %v418, %v419
        %v421 = vsel %vm411, %v405, 0.0
        %v422 = vsel %vm411, %v406, 0.0
        %v423 = vadd.f32 %v421, %v422
        %v424 = vrot.slane %v423, 4
        %v425 = vadd.f32 %v423, %v424
        %v426 = vrot.slane %v425, 2
        %v427 = vadd.f32 %v425, %v426
        %v428 = vrot.slane %v427, 1
        %v429 = vadd.f32 %v427, %v428
        %v430 = vadd.f32 %v420, 1.00001
        %v431 = vadd.f32 %v429, 1.00001
        %v432 = vrsqrt.pop %v430
        %v433 = vrsqrt.pop %v431
        %435 = vbcast.lane.b32.xlu0 %v432, 256
        %v436 = vpop.permute.xlu0 %435
        %s438 = sor.u32 256, 8
        %439 = vbcast.lane.b32.xlu0 %v432, %s438
        %v440 = vpop.permute.xlu0 %439
        %442 = vbcast.lane.b32.xlu0 %v433, 256
        %v443 = vpop.permute.xlu0 %442
        %s445 = sor.u32 256, 8
        %446 = vbcast.lane.b32.xlu0 %v433, %s445
        %v447 = vpop.permute.xlu0 %446
        %v448 = vmul.f32 %v436, %v436
        %v449 = vmul.f32 %v440, %v440
        %v450 = vmul.f32 %v443, %v443
        %v451 = vmul.f32 %v447, %v447
        %v452 = vmul.f32 %v436, %v407
        %v453 = vmul.f32 %v440, %v408
        %v454 = vmul.f32 %v443, %v409
        %v455 = vmul.f32 %v447, %v410
        %v457 = vsel %vm411, %v403, 0
        %v460 = vsel %vm411, %v404, 0
        %462 = vmatprep.subr.mxu0 0.0
        %463 = vmatpush1.msra.mxu0 0.0
        %464 = vmatprep.subr.mxu0 0.0
        %465 = vmatpush1.msra.mxu0 0.0
        %466 = vmatprep.subr.mxu0 0.0
        %467 = vmatpush1.msra.mxu0 0.0
        %468 = vmatprep.subr.mxu0 0.0
        %469 = vmatpush1.msra.mxu0 0.0
        %470 = vmatprep.subr.mxu0 0.0
        %471 = vmatpush1.msra.mxu0 0.0
        %472 = vmatprep.subr.mxu0 0.0
        %473 = vmatpush1.msra.mxu0 0.0
        %474 = vmatprep.subr.mxu0 0.0
        %475 = vmatpush1.msra.mxu0 0.0
        %476 = vmatprep.subr.mxu0 0.0
        %477 = vmatpush1.msra.mxu0 0.0
        %478 = vmatprep.subr.mxu0 0.0
        %479 = vmatpush1.msra.mxu0 0.0
        %480 = vmatprep.subr.mxu0 0.0
        %481 = vmatpush1.msra.mxu0 0.0
        %482 = vmatprep.subr.mxu0 0.0
        %483 = vmatpush1.msra.mxu0 0.0
        %484 = vmatprep.subr.mxu0 0.0
        %485 = vmatpush1.msra.mxu0 0.0
        %486 = vmatprep.subr.mxu0 0.0
        %487 = vmatpush1.msra.mxu0 0.0
        %488 = vmatprep.subr.mxu0 0.0
        %489 = vmatpush1.msra.mxu0 0.0
        %490 = vmatprep.subr.mxu0 0.0
        %491 = vmatpush1.msra.mxu0 %v453
        %492 = vmatprep.subr.mxu0 0.0
        %493 = vmatpush1.msra.mxu0 %v452
        %494 = vmatprep.subr.mxu0 0.0
        %495 = vmatpush2.msra.mxu0 0.0
        %496 = vmatprep.subr.mxu0 0.0
        %497 = vmatpush2.msra.mxu0 0.0
        %498 = vmatprep.subr.mxu0 0.0
        %499 = vmatpush2.msra.mxu0 0.0
        %500 = vmatprep.subr.mxu0 0.0
        %501 = vmatpush2.msra.mxu0 0.0
        %502 = vmatprep.subr.mxu0 0.0
        %503 = vmatpush2.msra.mxu0 0.0
        %504 = vmatprep.subr.mxu0 0.0
        %505 = vmatpush2.msra.mxu0 0.0
        %506 = vmatprep.subr.mxu0 0.0
        %507 = vmatpush2.msra.mxu0 0.0
        %508 = vmatprep.subr.mxu0 0.0
        %509 = vmatpush2.msra.mxu0 0.0
        %510 = vmatprep.subr.mxu0 0.0
        %511 = vmatpush2.msra.mxu0 0.0
        %512 = vmatprep.subr.mxu0 0.0
        %513 = vmatpush2.msra.mxu0 0.0
        %514 = vmatprep.subr.mxu0 0.0
        %515 = vmatpush2.msra.mxu0 0.0
        %516 = vmatprep.subr.mxu0 0.0
        %517 = vmatpush2.msra.mxu0 0.0
        %518 = vmatprep.subr.mxu0 0.0
        %519 = vmatpush2.msra.mxu0 0.0
        %520 = vmatprep.subr.mxu0 0.0
        %521 = vmatpush2.msra.mxu0 0.0
        %522 = vmatprep.subr.mxu0 0.0
        %523 = vmatpush2.msra.mxu0 0.0
        %524 = vmatprep.subr.mxu0 0.0
        %525 = vmatpush2.msra.mxu0 0.0
        %526 = vmatprep.mubr.f32.mxu0 0.0
        %527 = vmatmul.mubr.f32.gmra.mxu0 %v457
        %v528 = vpop.f32.mrf.mxu0
        %v529 = vadd.f32 0.0, %v528
        %v530 = vpop.f32.mrf.mxu0
        %531 = vmatprep.mubr.f32.mxu0 0.0
        %532 = vmatmul.mubr.f32.gmra.mxu0 %v460
        %v533 = vpop.f32.mrf.mxu0
        %v534 = vadd.f32 0.0, %v533
        %v535 = vpop.f32.mrf.mxu0
        %536 = vdwg.mxu0
        %v538 = vsel %vm411, %v405, 0
        %v541 = vsel %vm411, %v406, 0
        %543 = vmatprep.subr.mxu0 0.0
        %544 = vmatpush1.msra.mxu0 0.0
        %545 = vmatprep.subr.mxu0 0.0
        %546 = vmatpush1.msra.mxu0 0.0
        %547 = vmatprep.subr.mxu0 0.0
        %548 = vmatpush1.msra.mxu0 0.0
        %549 = vmatprep.subr.mxu0 0.0
        %550 = vmatpush1.msra.mxu0 0.0
        %551 = vmatprep.subr.mxu0 0.0
        %552 = vmatpush1.msra.mxu0 0.0
        %553 = vmatprep.subr.mxu0 0.0
        %554 = vmatpush1.msra.mxu0 0.0
        %555 = vmatprep.subr.mxu0 0.0
        %556 = vmatpush1.msra.mxu0 0.0
        %557 = vmatprep.subr.mxu0 0.0
        %558 = vmatpush1.msra.mxu0 0.0
        %559 = vmatprep.subr.mxu0 0.0
        %560 = vmatpush1.msra.mxu0 0.0
        %561 = vmatprep.subr.mxu0 0.0
        %562 = vmatpush1.msra.mxu0 0.0
        %563 = vmatprep.subr.mxu0 0.0
        %564 = vmatpush1.msra.mxu0 0.0
        %565 = vmatprep.subr.mxu0 0.0
        %566 = vmatpush1.msra.mxu0 0.0
        %567 = vmatprep.subr.mxu0 0.0
        %568 = vmatpush1.msra.mxu0 0.0
        %569 = vmatprep.subr.mxu0 0.0
        %570 = vmatpush1.msra.mxu0 0.0
        %571 = vmatprep.subr.mxu0 0.0
        %572 = vmatpush1.msra.mxu0 %v455
        %573 = vmatprep.subr.mxu0 0.0
        %574 = vmatpush1.msra.mxu0 %v454
        %575 = vmatprep.subr.mxu0 0.0
        %576 = vmatpush2.msra.mxu0 0.0
        %577 = vmatprep.subr.mxu0 0.0
        %578 = vmatpush2.msra.mxu0 0.0
        %579 = vmatprep.subr.mxu0 0.0
        %580 = vmatpush2.msra.mxu0 0.0
        %581 = vmatprep.subr.mxu0 0.0
        %582 = vmatpush2.msra.mxu0 0.0
        %583 = vmatprep.subr.mxu0 0.0
        %584 = vmatpush2.msra.mxu0 0.0
        %585 = vmatprep.subr.mxu0 0.0
        %586 = vmatpush2.msra.mxu0 0.0
        %587 = vmatprep.subr.mxu0 0.0
        %588 = vmatpush2.msra.mxu0 0.0
        %589 = vmatprep.subr.mxu0 0.0
        %590 = vmatpush2.msra.mxu0 0.0
        %591 = vmatprep.subr.mxu0 0.0
        %592 = vmatpush2.msra.mxu0 0.0
        %593 = vmatprep.subr.mxu0 0.0
        %594 = vmatpush2.msra.mxu0 0.0
        %595 = vmatprep.subr.mxu0 0.0
        %596 = vmatpush2.msra.mxu0 0.0
        %597 = vmatprep.subr.mxu0 0.0
        %598 = vmatpush2.msra.mxu0 0.0
        %599 = vmatprep.subr.mxu0 0.0
        %600 = vmatpush2.msra.mxu0 0.0
        %601 = vmatprep.subr.mxu0 0.0
        %602 = vmatpush2.msra.mxu0 0.0
        %603 = vmatprep.subr.mxu0 0.0
        %604 = vmatpush2.msra.mxu0 0.0
        %605 = vmatprep.subr.mxu0 0.0
        %606 = vmatpush2.msra.mxu0 0.0
        %607 = vmatprep.mubr.f32.mxu0 0.0
        %608 = vmatmul.mubr.f32.gmra.mxu0 %v538
        %v609 = vpop.f32.mrf.mxu0
        %v610 = vadd.f32 0.0, %v609
        %v611 = vpop.f32.mrf.mxu0
        %612 = vmatprep.mubr.f32.mxu0 0.0
        %613 = vmatmul.mubr.f32.gmra.mxu0 %v541
        %v614 = vpop.f32.mrf.mxu0
        %v615 = vadd.f32 0.0, %v614
        %v616 = vpop.f32.mrf.mxu0
        %617 = vdwg.mxu0
        %v618 = vmul.f32 %v436, %v529
        %v619 = vmul.f32 %v440, %v534
        %v620 = vmul.f32 %v443, %v610
        %v621 = vmul.f32 %v447, %v615
        %v622 = vmul.f32 %v448, %v407
        %v623 = vmul.f32 %v449, %v408
        %v624 = vmul.f32 %v450, %v409
        %v625 = vmul.f32 %v451, %v410
        %v626 = vadd.f32 %v618, %v622
        %v627 = vadd.f32 %v619, %v623
        %v628 = vadd.f32 %v620, %v624
        %v629 = vadd.f32 %v621, %v625
        %v630 = vld [vmem:[%s2] sm:$0xff]
        %v631 = vld [vmem:[%s3] sm:$0x1]
        %v633 = vlaneseq
        %v634 = vshrl.u32 %v633, 7
        %v635 = vsub.s32 0, %v634
        %v636 = vrot.slane %v631, %v635
        %vm638 = vcmask 64512
        %v640 = vsel %vm638, %v626, 0
        %v643 = vsel %vm638, %v627, 0
        %v646 = vsel %vm638, %v628, 0
        %v649 = vsel %vm638, %v629, 0
        %651 = vmatprep.subr.mxu0 0.0
        %652 = vmatpush1.msra.mxu0 0.0
        %653 = vmatprep.subr.mxu0 0.0
        %654 = vmatpush1.msra.mxu0 0.0
        %655 = vmatprep.subr.mxu0 0.0
        %656 = vmatpush1.msra.mxu0 0.0
        %657 = vmatprep.subr.mxu0 0.0
        %658 = vmatpush1.msra.mxu0 0.0
        %659 = vmatprep.subr.mxu0 0.0
        %660 = vmatpush1.msra.mxu0 0.0
        %661 = vmatprep.subr.mxu0 0.0
        %662 = vmatpush1.msra.mxu0 0.0
        %663 = vmatprep.subr.mxu0 0.0
        %664 = vmatpush1.msra.mxu0 0.0
        %665 = vmatprep.subr.mxu0 0.0
        %666 = vmatpush1.msra.mxu0 0.0
        %667 = vmatprep.subr.mxu0 0.0
        %668 = vmatpush1.msra.mxu0 0.0
        %669 = vmatprep.subr.mxu0 0.0
        %670 = vmatpush1.msra.mxu0 0.0
        %671 = vmatprep.subr.mxu0 0.0
        %672 = vmatpush1.msra.mxu0 0.0
        %673 = vmatprep.subr.mxu0 0.0
        %674 = vmatpush1.msra.mxu0 0.0
        %675 = vmatprep.subr.mxu0 0.0
        %676 = vmatpush1.msra.mxu0 0.0
        %677 = vmatprep.subr.mxu0 0.0
        %678 = vmatpush1.msra.mxu0 0.0
        %679 = vmatprep.subr.mxu0 0.0
        %680 = vmatpush1.msra.mxu0 0.0
        %681 = vmatprep.subr.mxu0 0.0
        %682 = vmatpush1.msra.mxu0 %v630
        %683 = vmatprep.subr.mxu0 0.0
        %684 = vmatpush2.msra.mxu0 0.0
        %685 = vmatprep.subr.mxu0 0.0
        %686 = vmatpush2.msra.mxu0 0.0
        %687 = vmatprep.subr.mxu0 0.0
        %688 = vmatpush2.msra.mxu0 0.0
        %689 = vmatprep.subr.mxu0 0.0
        %690 = vmatpush2.msra.mxu0 0.0
        %691 = vmatprep.subr.mxu0 0.0
        %692 = vmatpush2.msra.mxu0 0.0
        %693 = vmatprep.subr.mxu0 0.0
        %694 = vmatpush2.msra.mxu0 0.0
        %695 = vmatprep.subr.mxu0 0.0
        %696 = vmatpush2.msra.mxu0 0.0
        %697 = vmatprep.subr.mxu0 0.0
        %698 = vmatpush2.msra.mxu0 0.0
        %699 = vmatprep.subr.mxu0 0.0
        %700 = vmatpush2.msra.mxu0 0.0
        %701 = vmatprep.subr.mxu0 0.0
        %702 = vmatpush2.msra.mxu0 0.0
        %703 = vmatprep.subr.mxu0 0.0
        %704 = vmatpush2.msra.mxu0 0.0
        %705 = vmatprep.subr.mxu0 0.0
        %706 = vmatpush2.msra.mxu0 0.0
        %707 = vmatprep.subr.mxu0 0.0
        %708 = vmatpush2.msra.mxu0 0.0
        %709 = vmatprep.subr.mxu0 0.0
        %710 = vmatpush2.msra.mxu0 0.0
        %711 = vmatprep.subr.mxu0 0.0
        %712 = vmatpush2.msra.mxu0 0.0
        %713 = vmatprep.subr.mxu0 0.0
        %714 = vmatpush2.msra.mxu0 0.0
        %715 = vmatprep.mubr.f32.mxu0 0.0
        %716 = vmatmul.mubr.f32.gmra.mxu0 %v640
        %v717 = vpop.f32.mrf.mxu0
        %v718 = vadd.f32 %v636, %v717
        %v719 = vpop.f32.mrf.mxu0
        %720 = vmatprep.mubr.f32.mxu0 0.0
        %721 = vmatmul.mubr.f32.gmra.mxu0 %v643
        %v722 = vpop.f32.mrf.mxu0
        %v723 = vadd.f32 %v636, %v722
        %v724 = vpop.f32.mrf.mxu0
        %725 = vmatprep.mubr.f32.mxu0 0.0
        %726 = vmatmul.mubr.f32.gmra.mxu0 %v646
        %v727 = vpop.f32.mrf.mxu0
        %v728 = vadd.f32 %v636, %v727
        %v729 = vpop.f32.mrf.mxu0
        %730 = vmatprep.mubr.f32.mxu0 0.0
        %731 = vmatmul.mubr.f32.gmra.mxu0 %v649
        %v732 = vpop.f32.mrf.mxu0
        %v733 = vadd.f32 %v636, %v732
        %v734 = vpop.f32.mrf.mxu0
        %735 = vdwg.mxu0
        %v736 = vmax.f32 %v718, 0.0
        %v737 = vmax.f32 %v723, 0.0
        %v738 = vmax.f32 %v728, 0.0
        %v739 = vmax.f32 %v733, 0.0
        %v740 = vmul.f32 %v436, %v736
        %v741 = vmul.f32 %v440, %v737
        %v742 = vmul.f32 %v443, %v738
        %v743 = vmul.f32 %v447, %v739
        %744 = vmatprep.subr.mxu0 0.0
        %745 = vmatpush1.msra.mxu0 0.0
        %746 = vmatprep.subr.mxu0 0.0
        %747 = vmatpush1.msra.mxu0 0.0
        %748 = vmatprep.subr.mxu0 0.0
        %749 = vmatpush1.msra.mxu0 0.0
        %750 = vmatprep.subr.mxu0 0.0
        %751 = vmatpush1.msra.mxu0 0.0
        %752 = vmatprep.subr.mxu0 0.0
        %753 = vmatpush1.msra.mxu0 0.0
        %754 = vmatprep.subr.mxu0 0.0
        %755 = vmatpush1.msra.mxu0 0.0
        %756 = vmatprep.subr.mxu0 0.0
        %757 = vmatpush1.msra.mxu0 0.0
        %758 = vmatprep.subr.mxu0 0.0
        %759 = vmatpush1.msra.mxu0 0.0
        %760 = vmatprep.subr.mxu0 0.0
        %761 = vmatpush1.msra.mxu0 0.0
        %762 = vmatprep.subr.mxu0 0.0
        %763 = vmatpush1.msra.mxu0 0.0
        %764 = vmatprep.subr.mxu0 0.0
        %765 = vmatpush1.msra.mxu0 0.0
        %766 = vmatprep.subr.mxu0 0.0
        %767 = vmatpush1.msra.mxu0 0.0
        %768 = vmatprep.subr.mxu0 0.0
        %769 = vmatpush1.msra.mxu0 0.0
        %770 = vmatprep.subr.mxu0 0.0
        %771 = vmatpush1.msra.mxu0 0.0
        %772 = vmatprep.subr.mxu0 0.0
        %773 = vmatpush1.msra.mxu0 %v741
        %774 = vmatprep.subr.mxu0 0.0
        %775 = vmatpush1.msra.mxu0 %v740
        %776 = vmatprep.subr.mxu0 0.0
        %777 = vmatpush2.msra.mxu0 0.0
        %778 = vmatprep.subr.mxu0 0.0
        %779 = vmatpush2.msra.mxu0 0.0
        %780 = vmatprep.subr.mxu0 0.0
        %781 = vmatpush2.msra.mxu0 0.0
        %782 = vmatprep.subr.mxu0 0.0
        %783 = vmatpush2.msra.mxu0 0.0
        %784 = vmatprep.subr.mxu0 0.0
        %785 = vmatpush2.msra.mxu0 0.0
        %786 = vmatprep.subr.mxu0 0.0
        %787 = vmatpush2.msra.mxu0 0.0
        %788 = vmatprep.subr.mxu0 0.0
        %789 = vmatpush2.msra.mxu0 0.0
        %790 = vmatprep.subr.mxu0 0.0
        %791 = vmatpush2.msra.mxu0 0.0
        %792 = vmatprep.subr.mxu0 0.0
        %793 = vmatpush2.msra.mxu0 0.0
        %794 = vmatprep.subr.mxu0 0.0
        %795 = vmatpush2.msra.mxu0 0.0
        %796 = vmatprep.subr.mxu0 0.0
        %797 = vmatpush2.msra.mxu0 0.0
        %798 = vmatprep.subr.mxu0 0.0
        %799 = vmatpush2.msra.mxu0 0.0
        %800 = vmatprep.subr.mxu0 0.0
        %801 = vmatpush2.msra.mxu0 0.0
        %802 = vmatprep.subr.mxu0 0.0
        %803 = vmatpush2.msra.mxu0 0.0
        %804 = vmatprep.subr.mxu0 0.0
        %805 = vmatpush2.msra.mxu0 0.0
        %806 = vmatprep.subr.mxu0 0.0
        %807 = vmatpush2.msra.mxu0 0.0
        %808 = vmatprep.mubr.f32.mxu0 0.0
        %809 = vmatmul.mubr.f32.gmra.mxu0 %v457
        %v810 = vpop.f32.mrf.mxu0
        %v811 = vadd.f32 0.0, %v810
        %v812 = vpop.f32.mrf.mxu0
        %813 = vmatprep.mubr.f32.mxu0 0.0
        %814 = vmatmul.mubr.f32.gmra.mxu0 %v460
        %v815 = vpop.f32.mrf.mxu0
        %v816 = vadd.f32 0.0, %v815
        %v817 = vpop.f32.mrf.mxu0
        %818 = vdwg.mxu0
        %819 = vmatprep.subr.mxu0 0.0
        %820 = vmatpush1.msra.mxu0 0.0
        %821 = vmatprep.subr.mxu0 0.0
        %822 = vmatpush1.msra.mxu0 0.0
        %823 = vmatprep.subr.mxu0 0.0
        %824 = vmatpush1.msra.mxu0 0.0
        %825 = vmatprep.subr.mxu0 0.0
        %826 = vmatpush1.msra.mxu0 0.0
        %827 = vmatprep.subr.mxu0 0.0
        %828 = vmatpush1.msra.mxu0 0.0
        %829 = vmatprep.subr.mxu0 0.0
        %830 = vmatpush1.msra.mxu0 0.0
        %831 = vmatprep.subr.mxu0 0.0
        %832 = vmatpush1.msra.mxu0 0.0
        %833 = vmatprep.subr.mxu0 0.0
        %834 = vmatpush1.msra.mxu0 0.0
        %835 = vmatprep.subr.mxu0 0.0
        %836 = vmatpush1.msra.mxu0 0.0
        %837 = vmatprep.subr.mxu0 0.0
        %838 = vmatpush1.msra.mxu0 0.0
        %839 = vmatprep.subr.mxu0 0.0
        %840 = vmatpush1.msra.mxu0 0.0
        %841 = vmatprep.subr.mxu0 0.0
        %842 = vmatpush1.msra.mxu0 0.0
        %843 = vmatprep.subr.mxu0 0.0
        %844 = vmatpush1.msra.mxu0 0.0
        %845 = vmatprep.subr.mxu0 0.0
        %846 = vmatpush1.msra.mxu0 0.0
        %847 = vmatprep.subr.mxu0 0.0
        %848 = vmatpush1.msra.mxu0 %v743
        %849 = vmatprep.subr.mxu0 0.0
        %850 = vmatpush1.msra.mxu0 %v742
        %851 = vmatprep.subr.mxu0 0.0
        %852 = vmatpush2.msra.mxu0 0.0
        %853 = vmatprep.subr.mxu0 0.0
        %854 = vmatpush2.msra.mxu0 0.0
        %855 = vmatprep.subr.mxu0 0.0
        %856 = vmatpush2.msra.mxu0 0.0
        %857 = vmatprep.subr.mxu0 0.0
        %858 = vmatpush2.msra.mxu0 0.0
        %859 = vmatprep.subr.mxu0 0.0
        %860 = vmatpush2.msra.mxu0 0.0
        %861 = vmatprep.subr.mxu0 0.0
        %862 = vmatpush2.msra.mxu0 0.0
        %863 = vmatprep.subr.mxu0 0.0
        %864 = vmatpush2.msra.mxu0 0.0
        %865 = vmatprep.subr.mxu0 0.0
        %866 = vmatpush2.msra.mxu0 0.0
        %867 = vmatprep.subr.mxu0 0.0
        %868 = vmatpush2.msra.mxu0 0.0
        %869 = vmatprep.subr.mxu0 0.0
        %870 = vmatpush2.msra.mxu0 0.0
        %871 = vmatprep.subr.mxu0 0.0
        %872 = vmatpush2.msra.mxu0 0.0
        %873 = vmatprep.subr.mxu0 0.0
        %874 = vmatpush2.msra.mxu0 0.0
        %875 = vmatprep.subr.mxu0 0.0
        %876 = vmatpush2.msra.mxu0 0.0
        %877 = vmatprep.subr.mxu0 0.0
        %878 = vmatpush2.msra.mxu0 0.0
        %879 = vmatprep.subr.mxu0 0.0
        %880 = vmatpush2.msra.mxu0 0.0
        %881 = vmatprep.subr.mxu0 0.0
        %882 = vmatpush2.msra.mxu0 0.0
        %883 = vmatprep.mubr.f32.mxu0 0.0
        %884 = vmatmul.mubr.f32.gmra.mxu0 %v538
        %v885 = vpop.f32.mrf.mxu0
        %v886 = vadd.f32 0.0, %v885
        %v887 = vpop.f32.mrf.mxu0
        %888 = vmatprep.mubr.f32.mxu0 0.0
        %889 = vmatmul.mubr.f32.gmra.mxu0 %v541
        %v890 = vpop.f32.mrf.mxu0
        %v891 = vadd.f32 0.0, %v890
        %v892 = vpop.f32.mrf.mxu0
        %893 = vdwg.mxu0
        %v894 = vmul.f32 %v436, %v811
        %v895 = vmul.f32 %v440, %v816
        %v896 = vmul.f32 %v443, %v886
        %v897 = vmul.f32 %v447, %v891
        %v898 = vmul.f32 %v448, %v736
        %v899 = vmul.f32 %v449, %v737
        %v900 = vmul.f32 %v450, %v738
        %v901 = vmul.f32 %v451, %v739
        %v902 = vadd.f32 %v894, %v898
        %v903 = vadd.f32 %v895, %v899
        %v904 = vadd.f32 %v896, %v900
        %v905 = vadd.f32 %v897, %v901
        %v906 = vld [vmem:[%s4] sm:$0xff]
        %v907 = vld [vmem:[%s4 + $0x8] sm:$0xff]
        %v908 = vld [vmem:[%s4 + $0x10] sm:$0xff]
        %v909 = vld [vmem:[%s4 + $0x18] sm:$0xff]
        %v910 = vld [vmem:[%s5] sm:$0x1]
        %v912 = vlaneseq
        %v913 = vshrl.u32 %v912, 7
        %v914 = vsub.s32 0, %v913
        %v915 = vrot.slane %v910, %v914
        %vm917 = vcmask 261120
        %v919 = vsel %vm917, %v902, 0
        %v922 = vsel %vm917, %v903, 0
        %v925 = vsel %vm917, %v904, 0
        %v928 = vsel %vm917, %v905, 0
        %930 = vmatprep.subr.mxu0 0.0
        %931 = vmatpush1.msra.mxu0 0.0
        %932 = vmatprep.subr.mxu0 0.0
        %933 = vmatpush1.msra.mxu0 0.0
        %934 = vmatprep.subr.mxu0 0.0
        %935 = vmatpush1.msra.mxu0 0.0
        %936 = vmatprep.subr.mxu0 0.0
        %937 = vmatpush1.msra.mxu0 0.0
        %938 = vmatprep.subr.mxu0 0.0
        %939 = vmatpush1.msra.mxu0 0.0
        %940 = vmatprep.subr.mxu0 0.0
        %941 = vmatpush1.msra.mxu0 0.0
        %942 = vmatprep.subr.mxu0 0.0
        %943 = vmatpush1.msra.mxu0 0.0
        %944 = vmatprep.subr.mxu0 0.0
        %945 = vmatpush1.msra.mxu0 0.0
        %946 = vmatprep.subr.mxu0 0.0
        %947 = vmatpush1.msra.mxu0 0.0
        %948 = vmatprep.subr.mxu0 0.0
        %949 = vmatpush1.msra.mxu0 0.0
        %950 = vmatprep.subr.mxu0 0.0
        %951 = vmatpush1.msra.mxu0 0.0
        %952 = vmatprep.subr.mxu0 0.0
        %953 = vmatpush1.msra.mxu0 0.0
        %954 = vmatprep.subr.mxu0 0.0
        %955 = vmatpush1.msra.mxu0 %v909
        %956 = vmatprep.subr.mxu0 0.0
        %957 = vmatpush1.msra.mxu0 %v908
        %958 = vmatprep.subr.mxu0 0.0
        %959 = vmatpush1.msra.mxu0 %v907
        %960 = vmatprep.subr.mxu0 0.0
        %961 = vmatpush1.msra.mxu0 %v906
        %962 = vmatprep.subr.mxu0 0.0
        %963 = vmatpush2.msra.mxu0 0.0
        %964 = vmatprep.subr.mxu0 0.0
        %965 = vmatpush2.msra.mxu0 0.0
        %966 = vmatprep.subr.mxu0 0.0
        %967 = vmatpush2.msra.mxu0 0.0
        %968 = vmatprep.subr.mxu0 0.0
        %969 = vmatpush2.msra.mxu0 0.0
        %970 = vmatprep.subr.mxu0 0.0
        %971 = vmatpush2.msra.mxu0 0.0
        %972 = vmatprep.subr.mxu0 0.0
        %973 = vmatpush2.msra.mxu0 0.0
        %974 = vmatprep.subr.mxu0 0.0
        %975 = vmatpush2.msra.mxu0 0.0
        %976 = vmatprep.subr.mxu0 0.0
        %977 = vmatpush2.msra.mxu0 0.0
        %978 = vmatprep.subr.mxu0 0.0
        %979 = vmatpush2.msra.mxu0 0.0
        %980 = vmatprep.subr.mxu0 0.0
        %981 = vmatpush2.msra.mxu0 0.0
        %982 = vmatprep.subr.mxu0 0.0
        %983 = vmatpush2.msra.mxu0 0.0
        %984 = vmatprep.subr.mxu0 0.0
        %985 = vmatpush2.msra.mxu0 0.0
        %986 = vmatprep.subr.mxu0 0.0
        %987 = vmatpush2.msra.mxu0 0.0
        %988 = vmatprep.subr.mxu0 0.0
        %989 = vmatpush2.msra.mxu0 0.0
        %990 = vmatprep.subr.mxu0 0.0
        %991 = vmatpush2.msra.mxu0 0.0
        %992 = vmatprep.subr.mxu0 0.0
        %993 = vmatpush2.msra.mxu0 0.0
        %994 = vmatprep.mubr.f32.mxu0 0.0
        %995 = vmatmul.mubr.f32.gmra.mxu0 %v919
        %v996 = vpop.f32.mrf.mxu0
        %v997 = vadd.f32 %v915, %v996
        %v998 = vpop.f32.mrf.mxu0
        %999 = vmatprep.mubr.f32.mxu0 0.0
        %1000 = vmatmul.mubr.f32.gmra.mxu0 %v922
        %v1001 = vpop.f32.mrf.mxu0
        %v1002 = vadd.f32 %v915, %v1001
        %v1003 = vpop.f32.mrf.mxu0
        %1004 = vmatprep.mubr.f32.mxu0 0.0
        %1005 = vmatmul.mubr.f32.gmra.mxu0 %v925
        %v1006 = vpop.f32.mrf.mxu0
        %v1007 = vadd.f32 %v915, %v1006
        %v1008 = vpop.f32.mrf.mxu0
        %1009 = vmatprep.mubr.f32.mxu0 0.0
        %1010 = vmatmul.mubr.f32.gmra.mxu0 %v928
        %v1011 = vpop.f32.mrf.mxu0
        %v1012 = vadd.f32 %v915, %v1011
        %v1013 = vpop.f32.mrf.mxu0
        %1014 = vdwg.mxu0
        %v1015 = vmax.f32 %v997, 0.0
        %v1016 = vmax.f32 %v1002, 0.0
        %v1017 = vmax.f32 %v1007, 0.0
        %v1018 = vmax.f32 %v1012, 0.0
        %v1019 = vmul.f32 %v436, %v1015
        %v1020 = vmul.f32 %v440, %v1016
        %v1021 = vmul.f32 %v443, %v1017
        %v1022 = vmul.f32 %v447, %v1018
        %1023 = vmatprep.subr.mxu0 0.0
        %1024 = vmatpush1.msra.mxu0 0.0
        %1025 = vmatprep.subr.mxu0 0.0
        %1026 = vmatpush1.msra.mxu0 0.0
        %1027 = vmatprep.subr.mxu0 0.0
        %1028 = vmatpush1.msra.mxu0 0.0
        %1029 = vmatprep.subr.mxu0 0.0
        %1030 = vmatpush1.msra.mxu0 0.0
        %1031 = vmatprep.subr.mxu0 0.0
        %1032 = vmatpush1.msra.mxu0 0.0
        %1033 = vmatprep.subr.mxu0 0.0
        %1034 = vmatpush1.msra.mxu0 0.0
        %1035 = vmatprep.subr.mxu0 0.0
        %1036 = vmatpush1.msra.mxu0 0.0
        %1037 = vmatprep.subr.mxu0 0.0
        %1038 = vmatpush1.msra.mxu0 0.0
        %1039 = vmatprep.subr.mxu0 0.0
        %1040 = vmatpush1.msra.mxu0 0.0
        %1041 = vmatprep.subr.mxu0 0.0
        %1042 = vmatpush1.msra.mxu0 0.0
        %1043 = vmatprep.subr.mxu0 0.0
        %1044 = vmatpush1.msra.mxu0 0.0
        %1045 = vmatprep.subr.mxu0 0.0
        %1046 = vmatpush1.msra.mxu0 0.0
        %1047 = vmatprep.subr.mxu0 0.0
        %1048 = vmatpush1.msra.mxu0 0.0
        %1049 = vmatprep.subr.mxu0 0.0
        %1050 = vmatpush1.msra.mxu0 0.0
        %1051 = vmatprep.subr.mxu0 0.0
        %1052 = vmatpush1.msra.mxu0 %v1020
        %1053 = vmatprep.subr.mxu0 0.0
        %1054 = vmatpush1.msra.mxu0 %v1019
        %1055 = vmatprep.subr.mxu0 0.0
        %1056 = vmatpush2.msra.mxu0 0.0
        %1057 = vmatprep.subr.mxu0 0.0
        %1058 = vmatpush2.msra.mxu0 0.0
        %1059 = vmatprep.subr.mxu0 0.0
        %1060 = vmatpush2.msra.mxu0 0.0
        %1061 = vmatprep.subr.mxu0 0.0
        %1062 = vmatpush2.msra.mxu0 0.0
        %1063 = vmatprep.subr.mxu0 0.0
        %1064 = vmatpush2.msra.mxu0 0.0
        %1065 = vmatprep.subr.mxu0 0.0
        %1066 = vmatpush2.msra.mxu0 0.0
        %1067 = vmatprep.subr.mxu0 0.0
        %1068 = vmatpush2.msra.mxu0 0.0
        %1069 = vmatprep.subr.mxu0 0.0
        %1070 = vmatpush2.msra.mxu0 0.0
        %1071 = vmatprep.subr.mxu0 0.0
        %1072 = vmatpush2.msra.mxu0 0.0
        %1073 = vmatprep.subr.mxu0 0.0
        %1074 = vmatpush2.msra.mxu0 0.0
        %1075 = vmatprep.subr.mxu0 0.0
        %1076 = vmatpush2.msra.mxu0 0.0
        %1077 = vmatprep.subr.mxu0 0.0
        %1078 = vmatpush2.msra.mxu0 0.0
        %1079 = vmatprep.subr.mxu0 0.0
        %1080 = vmatpush2.msra.mxu0 0.0
        %1081 = vmatprep.subr.mxu0 0.0
        %1082 = vmatpush2.msra.mxu0 0.0
        %1083 = vmatprep.subr.mxu0 0.0
        %1084 = vmatpush2.msra.mxu0 0.0
        %1085 = vmatprep.subr.mxu0 0.0
        %1086 = vmatpush2.msra.mxu0 0.0
        %1087 = vmatprep.mubr.f32.mxu0 0.0
        %1088 = vmatmul.mubr.f32.gmra.mxu0 %v457
        %v1089 = vpop.f32.mrf.mxu0
        %v1090 = vadd.f32 0.0, %v1089
        %v1091 = vpop.f32.mrf.mxu0
        %1092 = vmatprep.mubr.f32.mxu0 0.0
        %1093 = vmatmul.mubr.f32.gmra.mxu0 %v460
        %v1094 = vpop.f32.mrf.mxu0
        %v1095 = vadd.f32 0.0, %v1094
        %v1096 = vpop.f32.mrf.mxu0
        %1097 = vdwg.mxu0
        %1098 = vmatprep.subr.mxu0 0.0
        %1099 = vmatpush1.msra.mxu0 0.0
        %1100 = vmatprep.subr.mxu0 0.0
        %1101 = vmatpush1.msra.mxu0 0.0
        %1102 = vmatprep.subr.mxu0 0.0
        %1103 = vmatpush1.msra.mxu0 0.0
        %1104 = vmatprep.subr.mxu0 0.0
        %1105 = vmatpush1.msra.mxu0 0.0
        %1106 = vmatprep.subr.mxu0 0.0
        %1107 = vmatpush1.msra.mxu0 0.0
        %1108 = vmatprep.subr.mxu0 0.0
        %1109 = vmatpush1.msra.mxu0 0.0
        %1110 = vmatprep.subr.mxu0 0.0
        %1111 = vmatpush1.msra.mxu0 0.0
        %1112 = vmatprep.subr.mxu0 0.0
        %1113 = vmatpush1.msra.mxu0 0.0
        %1114 = vmatprep.subr.mxu0 0.0
        %1115 = vmatpush1.msra.mxu0 0.0
        %1116 = vmatprep.subr.mxu0 0.0
        %1117 = vmatpush1.msra.mxu0 0.0
        %1118 = vmatprep.subr.mxu0 0.0
        %1119 = vmatpush1.msra.mxu0 0.0
        %1120 = vmatprep.subr.mxu0 0.0
        %1121 = vmatpush1.msra.mxu0 0.0
        %1122 = vmatprep.subr.mxu0 0.0
        %1123 = vmatpush1.msra.mxu0 0.0
        %1124 = vmatprep.subr.mxu0 0.0
        %1125 = vmatpush1.msra.mxu0 0.0
        %1126 = vmatprep.subr.mxu0 0.0
        %1127 = vmatpush1.msra.mxu0 %v1022
        %1128 = vmatprep.subr.mxu0 0.0
        %1129 = vmatpush1.msra.mxu0 %v1021
        %1130 = vmatprep.subr.mxu0 0.0
        %1131 = vmatpush2.msra.mxu0 0.0
        %1132 = vmatprep.subr.mxu0 0.0
        %1133 = vmatpush2.msra.mxu0 0.0
        %1134 = vmatprep.subr.mxu0 0.0
        %1135 = vmatpush2.msra.mxu0 0.0
        %1136 = vmatprep.subr.mxu0 0.0
        %1137 = vmatpush2.msra.mxu0 0.0
        %1138 = vmatprep.subr.mxu0 0.0
        %1139 = vmatpush2.msra.mxu0 0.0
        %1140 = vmatprep.subr.mxu0 0.0
        %1141 = vmatpush2.msra.mxu0 0.0
        %1142 = vmatprep.subr.mxu0 0.0
        %1143 = vmatpush2.msra.mxu0 0.0
        %1144 = vmatprep.subr.mxu0 0.0
        %1145 = vmatpush2.msra.mxu0 0.0
        %1146 = vmatprep.subr.mxu0 0.0
        %1147 = vmatpush2.msra.mxu0 0.0
        %1148 = vmatprep.subr.mxu0 0.0
        %1149 = vmatpush2.msra.mxu0 0.0
        %1150 = vmatprep.subr.mxu0 0.0
        %1151 = vmatpush2.msra.mxu0 0.0
        %1152 = vmatprep.subr.mxu0 0.0
        %1153 = vmatpush2.msra.mxu0 0.0
        %1154 = vmatprep.subr.mxu0 0.0
        %1155 = vmatpush2.msra.mxu0 0.0
        %1156 = vmatprep.subr.mxu0 0.0
        %1157 = vmatpush2.msra.mxu0 0.0
        %1158 = vmatprep.subr.mxu0 0.0
        %1159 = vmatpush2.msra.mxu0 0.0
        %1160 = vmatprep.subr.mxu0 0.0
        %1161 = vmatpush2.msra.mxu0 0.0
        %1162 = vmatprep.mubr.f32.mxu0 0.0
        %1163 = vmatmul.mubr.f32.gmra.mxu0 %v538
        %v1164 = vpop.f32.mrf.mxu0
        %v1165 = vadd.f32 0.0, %v1164
        %v1166 = vpop.f32.mrf.mxu0
        %1167 = vmatprep.mubr.f32.mxu0 0.0
        %1168 = vmatmul.mubr.f32.gmra.mxu0 %v541
        %v1169 = vpop.f32.mrf.mxu0
        %v1170 = vadd.f32 0.0, %v1169
        %v1171 = vpop.f32.mrf.mxu0
        %1172 = vdwg.mxu0
        %v1173 = vmul.f32 %v436, %v1090
        %v1174 = vmul.f32 %v440, %v1095
        %v1175 = vmul.f32 %v443, %v1165
        %v1176 = vmul.f32 %v447, %v1170
        %v1177 = vmul.f32 %v448, %v1015
        %v1178 = vmul.f32 %v449, %v1016
        %v1179 = vmul.f32 %v450, %v1017
        %v1180 = vmul.f32 %v451, %v1018
        %v1181 = vadd.f32 %v1173, %v1177
        %v1182 = vadd.f32 %v1174, %v1178
        %v1183 = vadd.f32 %v1175, %v1179
        %v1184 = vadd.f32 %v1176, %v1180
        %v1185 = vld [vmem:[#allocation2] sm:$0xff]
        %v1186 = vld [vmem:[#allocation2 + $0x8] sm:$0xff]
        %v1187 = vld [vmem:[#allocation2 + $0x10] sm:$0xff]
        %v1188 = vld [vmem:[#allocation2 + $0x18] sm:$0xff]
        %v1189 = vld [vmem:[%s7] sm:$0x1]
        %v1191 = vlaneseq
        %v1192 = vshrl.u32 %v1191, 7
        %v1193 = vsub.s32 0, %v1192
        %v1194 = vrot.slane %v1189, %v1193
        %v1197 = vsel %vm917, %v1181, 0
        %v1200 = vsel %vm917, %v1182, 0
        %v1203 = vsel %vm917, %v1183, 0
        %v1206 = vsel %vm917, %v1184, 0
        %1208 = vmatprep.subr.mxu0 0.0
        %1209 = vmatpush1.msra.mxu0 0.0
        %1210 = vmatprep.subr.mxu0 0.0
        %1211 = vmatpush1.msra.mxu0 0.0
        %1212 = vmatprep.subr.mxu0 0.0
        %1213 = vmatpush1.msra.mxu0 0.0
        %1214 = vmatprep.subr.mxu0 0.0
        %1215 = vmatpush1.msra.mxu0 0.0
        %1216 = vmatprep.subr.mxu0 0.0
        %1217 = vmatpush1.msra.mxu0 0.0
        %1218 = vmatprep.subr.mxu0 0.0
        %1219 = vmatpush1.msra.mxu0 0.0
        %1220 = vmatprep.subr.mxu0 0.0
        %1221 = vmatpush1.msra.mxu0 0.0
        %1222 = vmatprep.subr.mxu0 0.0
        %1223 = vmatpush1.msra.mxu0 0.0
        %1224 = vmatprep.subr.mxu0 0.0
        %1225 = vmatpush1.msra.mxu0 0.0
        %1226 = vmatprep.subr.mxu0 0.0
        %1227 = vmatpush1.msra.mxu0 0.0
        %1228 = vmatprep.subr.mxu0 0.0
        %1229 = vmatpush1.msra.mxu0 0.0
        %1230 = vmatprep.subr.mxu0 0.0
        %1231 = vmatpush1.msra.mxu0 0.0
        %1232 = vmatprep.subr.mxu0 0.0
        %1233 = vmatpush1.msra.mxu0 %v1188
        %1234 = vmatprep.subr.mxu0 0.0
        %1235 = vmatpush1.msra.mxu0 %v1187
        %1236 = vmatprep.subr.mxu0 0.0
        %1237 = vmatpush1.msra.mxu0 %v1186
        %1238 = vmatprep.subr.mxu0 0.0
        %1239 = vmatpush1.msra.mxu0 %v1185
        %1240 = vmatprep.subr.mxu0 0.0
        %1241 = vmatpush2.msra.mxu0 0.0
        %1242 = vmatprep.subr.mxu0 0.0
        %1243 = vmatpush2.msra.mxu0 0.0
        %1244 = vmatprep.subr.mxu0 0.0
        %1245 = vmatpush2.msra.mxu0 0.0
        %1246 = vmatprep.subr.mxu0 0.0
        %1247 = vmatpush2.msra.mxu0 0.0
        %1248 = vmatprep.subr.mxu0 0.0
        %1249 = vmatpush2.msra.mxu0 0.0
        %1250 = vmatprep.subr.mxu0 0.0
        %1251 = vmatpush2.msra.mxu0 0.0
        %1252 = vmatprep.subr.mxu0 0.0
        %1253 = vmatpush2.msra.mxu0 0.0
        %1254 = vmatprep.subr.mxu0 0.0
        %1255 = vmatpush2.msra.mxu0 0.0
        %1256 = vmatprep.subr.mxu0 0.0
        %1257 = vmatpush2.msra.mxu0 0.0
        %1258 = vmatprep.subr.mxu0 0.0
        %1259 = vmatpush2.msra.mxu0 0.0
        %1260 = vmatprep.subr.mxu0 0.0
        %1261 = vmatpush2.msra.mxu0 0.0
        %1262 = vmatprep.subr.mxu0 0.0
        %1263 = vmatpush2.msra.mxu0 0.0
        %1264 = vmatprep.subr.mxu0 0.0
        %1265 = vmatpush2.msra.mxu0 0.0
        %1266 = vmatprep.subr.mxu0 0.0
        %1267 = vmatpush2.msra.mxu0 0.0
        %1268 = vmatprep.subr.mxu0 0.0
        %1269 = vmatpush2.msra.mxu0 0.0
        %1270 = vmatprep.subr.mxu0 0.0
        %1271 = vmatpush2.msra.mxu0 0.0
        %1272 = vmatprep.mubr.f32.mxu0 0.0
        %1273 = vmatmul.mubr.f32.gmra.mxu0 %v1197
        %v1274 = vpop.f32.mrf.mxu0
        %v1275 = vadd.f32 %v1194, %v1274
        %v1276 = vpop.f32.mrf.mxu0
        %1277 = vmatprep.mubr.f32.mxu0 0.0
        %1278 = vmatmul.mubr.f32.gmra.mxu0 %v1200
        %v1279 = vpop.f32.mrf.mxu0
        %v1280 = vadd.f32 %v1194, %v1279
        %v1281 = vpop.f32.mrf.mxu0
        %1282 = vmatprep.mubr.f32.mxu0 0.0
        %1283 = vmatmul.mubr.f32.gmra.mxu0 %v1203
        %v1284 = vpop.f32.mrf.mxu0
        %v1285 = vadd.f32 %v1194, %v1284
        %v1286 = vpop.f32.mrf.mxu0
        %1287 = vmatprep.mubr.f32.mxu0 0.0
        %1288 = vmatmul.mubr.f32.gmra.mxu0 %v1206
        %v1289 = vpop.f32.mrf.mxu0
        %v1290 = vadd.f32 %v1194, %v1289
        %v1291 = vpop.f32.mrf.mxu0
        %1292 = vdwg.mxu0
        %v1293 = vmax.f32 %v1275, 0.0
        %v1294 = vmax.f32 %v1280, 0.0
        %v1295 = vmax.f32 %v1285, 0.0
        %v1296 = vmax.f32 %v1290, 0.0
        %v1297 = vsel %vm917, %v1293, -inf
        %v1298 = vsel %vm917, %v1294, -inf
        %v1299 = vmax.f32 %v1297, %v1298
        %v1300 = vrot.slane %v1299, 4
        %v1301 = vmax.f32 %v1299, %v1300
        %v1302 = vrot.slane %v1301, 2
        %v1303 = vmax.f32 %v1301, %v1302
        %v1304 = vrot.slane %v1303, 1
        %v1305 = vmax.f32 %v1303, %v1304
        %v1306 = vsel %vm917, %v1295, -inf
        %v1307 = vsel %vm917, %v1296, -inf
        %v1308 = vmax.f32 %v1306, %v1307
        %v1309 = vrot.slane %v1308, 4
        %v1310 = vmax.f32 %v1308, %v1309
        %v1311 = vrot.slane %v1310, 2
        %v1312 = vmax.f32 %v1310, %v1311
        %v1313 = vrot.slane %v1312, 1
        %v1314 = vmax.f32 %v1312, %v1313
        %v1315 = vld [vmem:[%s8] sm:$0xff]
        %v1316 = vld [vmem:[%s8 + $0x8] sm:$0xff]
        %v1317 = vld [vmem:[%s8 + $0x10] sm:$0xff]
        %v1318 = vld [vmem:[%s8 + $0x18] sm:$0xff]
        %v1319 = vld [vmem:[%s9] sm:$0x1]
        %v1321 = vlaneseq
        %v1322 = vshrl.u32 %v1321, 7
        %v1323 = vsub.s32 0, %v1322
        %v1324 = vrot.slane %v1319, %v1323
        %vm1328 = vcmask 1041409
        %v1329 = vsel %vm1328, %v1314, %v1305
        %v1330 = vsel %vm917, %v1329, 0
        %1332 = vmatprep.subr.mxu0 0.0
        %1333 = vmatpush1.msra.mxu0 0.0
        %1334 = vmatprep.subr.mxu0 0.0
        %1335 = vmatpush1.msra.mxu0 0.0
        %1336 = vmatprep.subr.mxu0 0.0
        %1337 = vmatpush1.msra.mxu0 0.0
        %1338 = vmatprep.subr.mxu0 0.0
        %1339 = vmatpush1.msra.mxu0 0.0
        %1340 = vmatprep.subr.mxu0 0.0
        %1341 = vmatpush1.msra.mxu0 0.0
        %1342 = vmatprep.subr.mxu0 0.0
        %1343 = vmatpush1.msra.mxu0 0.0
        %1344 = vmatprep.subr.mxu0 0.0
        %1345 = vmatpush1.msra.mxu0 0.0
        %1346 = vmatprep.subr.mxu0 0.0
        %1347 = vmatpush1.msra.mxu0 0.0
        %1348 = vmatprep.subr.mxu0 0.0
        %1349 = vmatpush1.msra.mxu0 0.0
        %1350 = vmatprep.subr.mxu0 0.0
        %1351 = vmatpush1.msra.mxu0 0.0
        %1352 = vmatprep.subr.mxu0 0.0
        %1353 = vmatpush1.msra.mxu0 0.0
        %1354 = vmatprep.subr.mxu0 0.0
        %1355 = vmatpush1.msra.mxu0 0.0
        %1356 = vmatprep.subr.mxu0 0.0
        %1357 = vmatpush1.msra.mxu0 %v1318
        %1358 = vmatprep.subr.mxu0 0.0
        %1359 = vmatpush1.msra.mxu0 %v1317
        %1360 = vmatprep.subr.mxu0 0.0
        %1361 = vmatpush1.msra.mxu0 %v1316
        %1362 = vmatprep.subr.mxu0 0.0
        %1363 = vmatpush1.msra.mxu0 %v1315
        %1364 = vmatprep.subr.mxu0 0.0
        %1365 = vmatpush2.msra.mxu0 0.0
        %1366 = vmatprep.subr.mxu0 0.0
        %1367 = vmatpush2.msra.mxu0 0.0
        %1368 = vmatprep.subr.mxu0 0.0
        %1369 = vmatpush2.msra.mxu0 0.0
        %1370 = vmatprep.subr.mxu0 0.0
        %1371 = vmatpush2.msra.mxu0 0.0
        %1372 = vmatprep.subr.mxu0 0.0
        %1373 = vmatpush2.msra.mxu0 0.0
        %1374 = vmatprep.subr.mxu0 0.0
        %1375 = vmatpush2.msra.mxu0 0.0
        %1376 = vmatprep.subr.mxu0 0.0
        %1377 = vmatpush2.msra.mxu0 0.0
        %1378 = vmatprep.subr.mxu0 0.0
        %1379 = vmatpush2.msra.mxu0 0.0
        %1380 = vmatprep.subr.mxu0 0.0
        %1381 = vmatpush2.msra.mxu0 0.0
        %1382 = vmatprep.subr.mxu0 0.0
        %1383 = vmatpush2.msra.mxu0 0.0
        %1384 = vmatprep.subr.mxu0 0.0
        %1385 = vmatpush2.msra.mxu0 0.0
        %1386 = vmatprep.subr.mxu0 0.0
        %1387 = vmatpush2.msra.mxu0 0.0
        %1388 = vmatprep.subr.mxu0 0.0
        %1389 = vmatpush2.msra.mxu0 0.0
        %1390 = vmatprep.subr.mxu0 0.0
        %1391 = vmatpush2.msra.mxu0 0.0
        %1392 = vmatprep.subr.mxu0 0.0
        %1393 = vmatpush2.msra.mxu0 0.0
        %1394 = vmatprep.subr.mxu0 0.0
        %1395 = vmatpush2.msra.mxu0 0.0
        %1396 = vmatprep.mubr.f32.mxu0 0.0
        %1397 = vmatmul.mubr.f32.gmra.mxu0 %v1330
        %v1398 = vpop.f32.mrf.mxu0
        %v1399 = vadd.f32 %v1324, %v1398
        %v1400 = vpop.f32.mrf.mxu0
        %1401 = vdwg.mxu0
        %vm1402 = vcmask 58368
        %1403 = vst.msk [vmem:[%s388] sm:$0x3] %vm1402, %v1399
        %s1404 = sand.u32 %s253, 1
        %s1405 = scalar_lea.sflag [#allocation4], %s1404
        %s1406 = sand.u32 %s253, 1
        %s1407 = smul.addr %s1406, 2
        %s1408 = scalar_lea.vmem [#allocation5], %s1407
        // Predicated region
        $region65: #{tpu_custom_call.1} parent=59 // pred_check
          %p1409 = pneg %p263
        $region66: #{tpu_custom_call.1} parent=59 // pred_check_branch
          %1411 = sbr.rel (%p1409) target = $region68
        $region67: #{tpu_custom_call.1} parent=59 // pred_region
          %s1413 = ssub.s32 32, 32
          %1414 = vsyncadd %s1405, %s1413
          %s1415 = smul.addr %s25, 32
          %s1416 = scalar_lea.hbm %s10, %s1415
          %s1418 = sshll.u32 %s1408, 4
          %s1419 = int_to_ptr.vmem [resolvable:$true] %s1418
          %1421 = dma.vmem_to_hbm [thread:$0]  %s1419, 32, %s1416, %s1405
        $region68: #{tpu_custom_call.1} parent=59 // pred_fallthru
          _
      $region60: #{tpu_custom_call.1} parent=5 // pred_fallthru
        _
      %p1422 = scmp.le.s32.totalorder 2, %s20
      // Predicated region
      $region69: #{tpu_custom_call.1} parent=5 // pred_check
        %p1423 = pneg %p1422
      $region70: #{tpu_custom_call.1} parent=5 // pred_check_branch
        %1425 = sbr.rel (%p1423) target = $region72
      $region71: #{tpu_custom_call.1} parent=5 // pred_region
        %s1426 = ssub.s32 %s20, 2
        // Predicated region
        $region73: #{tpu_custom_call.1} parent=71 // pred_check
          %p1427 = pneg %p269
        $region74: #{tpu_custom_call.1} parent=71 // pred_check_branch
          %1429 = sbr.rel (%p1427) target = $region76
        $region75: #{tpu_custom_call.1} parent=71 // pred_region
          %s1430 = sand.u32 %s254, 1
          %s1431 = scalar_lea.sflag [#allocation4], %s1430
          %s1432 = sand.u32 %s254, 1
          %s1433 = smul.addr %s1432, 2
          %s1434 = scalar_lea.vmem [#allocation5], %s1433
          %1435 = dma.done %s1431, 32
        $region76: #{tpu_custom_call.1} parent=71 // pred_fallthru
          _
      $region72: #{tpu_custom_call.1} parent=5 // pred_fallthru
        _
    $region6: #{tpu_custom_call.1} parent=1 // loop_footer
      %s24 = sadd.s32 1, %s20
    $region7: #{tpu_custom_call.1} parent=1 // loop_footer_branch
      %19 = sbr.rel target = $region3
    $region8: #{tpu_custom_call.1} parent=1 // loop_exit
      _
    %1436 = vsyncpa [#allocation3], 1
    %s1437 = scalar_lea.sflag [#allocation3], 1
    %1438 = vsyncpa %s1437, 1
    %1439 = vsyncpa [#allocation4], 1
    %s1440 = scalar_lea.sflag [#allocation4], 1
    %1441 = vsyncpa %s1440, 1

</llo_original>
